<compile_context>
chip_gen: v5e
topology: v5e:2x2
jax: 0.10.0
libtpu: 0.0.40
codegen_flags: <defaults>
</compile_context>

<pallas_src>
import functools

import jax
import jax.numpy as jnp
from jax import lax
from jax.experimental import pallas as pl
from jax.experimental.pallas import tpu as pltpu

EPS = 1e-5  # CLIP LayerNorm eps


def _layernorm(x, w, b):
    mu = jnp.mean(x, axis=-1, keepdims=True)
    var = jnp.mean(jnp.square(x - mu), axis=-1, keepdims=True)
    return (x - mu) * lax.rsqrt(var + EPS) * w + b


# ----------------------------------------------------------------------------
# Kernel 1: full transformer stack.
#   grid = (B // Bt, L); batch axis "parallel", layer axis "arbitrary".
#   x stays resident in VMEM scratch across layers; weights are per-layer
#   blocks of stacked (L, ...) arrays, so Pallas prefetches layer l+1's weights
#   while layer l computes.
# ----------------------------------------------------------------------------
def _transformer_kernel(x_ref, pos_ref,
                        ln1w, ln1b, wqkv, bqkv, wo, bo,
                        ln2w, ln2b, wfc, bfc, wpj, bpj,
                        o_ref, xs_ref, att_ref, *, num_heads):
    l = pl.program_id(1)
    L = pl.num_programs(1)
    Bt, S, D = x_ref.shape
    M = Bt * S
    dh = D // num_heads
    scale = 1.0 / (dh ** 0.5)
    bf16 = jnp.bfloat16
    f32 = jnp.float32

    # layer 0: load x from HBM block and fuse the positional-embedding add.
    @pl.when(l == 0)
    def _():
        xs_ref[...] = x_ref[...].astype(f32) + pos_ref[...].astype(f32)

    x = xs_ref[...]                               # (Bt, S, D) f32, resident
    x2 = x.reshape(M, D)

    # ---------------- attention sub-block ----------------
    h = _layernorm(x2, ln1w[0], ln1b[0])          # (M, D) f32
    qkv = jnp.dot(h.astype(bf16), wqkv[0],
                  preferred_element_type=f32) + bqkv[0]          # (M, 3D) f32
    q = qkv[:, :D].reshape(Bt, S, D)
    k = qkv[:, D:2 * D].reshape(Bt, S, D)
    v = qkv[:, 2 * D:].reshape(Bt, S, D)

    row = lax.broadcasted_iota(jnp.int32, (Bt, S, S), 1)
    col = lax.broadcasted_iota(jnp.int32, (Bt, S, S), 2)
    causal = col > row                            # True => masked out
    mask_val = jnp.float32(jnp.finfo(jnp.float32).min)

    # per-head, batched over the Bt sequences; results assembled into scratch.
    for hh in range(num_heads):
        sl = slice(hh * dh, (hh + 1) * dh)
        qh = q[:, :, sl].astype(bf16)             # (Bt, S, dh)
        kh = k[:, :, sl].astype(bf16)
        vh = v[:, :, sl].astype(bf16)
        s = jnp.einsum('bqd,bkd->bqk', qh, kh,
                       preferred_element_type=f32) * scale       # (Bt, S, S)
        s = jnp.where(causal, mask_val, s)
        m = jnp.max(s, axis=-1, keepdims=True)
        e = jnp.exp(s - m)
        denom = jnp.sum(e, axis=-1, keepdims=True)
        p = e * pl.reciprocal(denom, approx=True)
        oh = jnp.einsum('bqk,bkd->bqd', p.astype(bf16), vh,
                        preferred_element_type=f32)              # (Bt, S, dh)
        att_ref[:, :, sl] = oh

    att = att_ref[...].reshape(M, D)
    att = jnp.dot(att.astype(bf16), wo[0],
                  preferred_element_type=f32) + bo[0]
    x2 = x2 + att

    # ---------------- MLP sub-block (QuickGELU) ----------------
    h2 = _layernorm(x2, ln2w[0], ln2b[0])
    h2 = jnp.dot(h2.astype(bf16), wfc[0],
                 preferred_element_type=f32) + bfc[0]
    h2 = h2 * jax.nn.sigmoid(1.702 * h2)
    h2 = jnp.dot(h2.astype(bf16), wpj[0],
                 preferred_element_type=f32) + bpj[0]
    x2 = x2 + h2

    xs_ref[...] = x2.reshape(Bt, S, D)

    @pl.when(l == L - 1)
    def _():
        o_ref[...] = xs_ref[...].astype(o_ref.dtype)


def text_transformer(prompts, params, num_heads, bt=None):
    B, S, D = prompts.shape
    L = params['w_qkv'].shape[0]
    if bt is None:
        divisors = [d for d in (8, 4, 2, 1) if B % d == 0]
        # prefer >= 2 batch blocks (keeps both v7x TensorCores busy), else max M.
        bt = next((d for d in divisors if B // d >= 2), divisors[0])
    nb = B // bt

    wmap = lambda b, l: (l, 0, 0)
    in_specs = [
        pl.BlockSpec((bt, S, D), lambda b, l: (b, 0, 0)),    # x
        pl.BlockSpec((S, D), lambda b, l: (0, 0)),           # positional embedding
        pl.BlockSpec((1, 1, D), wmap),                       # ln1_w
        pl.BlockSpec((1, 1, D), wmap),                       # ln1_b
        pl.BlockSpec((1, D, 3 * D), wmap),                   # w_qkv (bf16)
        pl.BlockSpec((1, 1, 3 * D), wmap),                   # b_qkv
        pl.BlockSpec((1, D, D), wmap),                       # w_o   (bf16)
        pl.BlockSpec((1, 1, D), wmap),                       # b_o
        pl.BlockSpec((1, 1, D), wmap),                       # ln2_w
        pl.BlockSpec((1, 1, D), wmap),                       # ln2_b
        pl.BlockSpec((1, D, 4 * D), wmap),                   # w_fc  (bf16)
        pl.BlockSpec((1, 1, 4 * D), wmap),                   # b_fc
        pl.BlockSpec((1, 4 * D, D), wmap),                   # w_proj(bf16)
        pl.BlockSpec((1, 1, D), wmap),                       # b_proj
    ]

    kernel = functools.partial(_transformer_kernel, num_heads=num_heads)
    return pl.pallas_call(
        kernel,
        out_shape=jax.ShapeDtypeStruct((B, S, D), prompts.dtype),
        grid=(nb, L),
        in_specs=in_specs,
        out_specs=pl.BlockSpec((bt, S, D), lambda b, l: (b, 0, 0)),
        scratch_shapes=[pltpu.VMEM((bt, S, D), jnp.float32),   # running x
                        pltpu.VMEM((bt, S, D), jnp.float32)],  # head-output slab
        compiler_params=pltpu.CompilerParams(
            dimension_semantics=("parallel", "arbitrary"),
            vmem_limit_bytes=48 * 1024 * 1024),
    )(prompts, params['pos'],
      params['ln1_w'], params['ln1_b'], params['w_qkv'], params['b_qkv'],
      params['w_o'], params['b_o'], params['ln2_w'], params['ln2_b'],
      params['w_fc'], params['b_fc'], params['w_proj'], params['b_proj'])


# ----------------------------------------------------------------------------
# Kernel 2: ln_final on the gathered EOT rows + text_projection (one M=B GEMM)
# ----------------------------------------------------------------------------
def _final_kernel(x_ref, lnw, lnb, proj, o_ref):
    x = x_ref[...].astype(jnp.float32)            # (B, D)
    h = _layernorm(x, lnw[...], lnb[...])
    o_ref[...] = jnp.dot(h.astype(jnp.bfloat16), proj[...],
                         preferred_element_type=jnp.float32).astype(o_ref.dtype)


def final_projection(rows, ln_w, ln_b, proj):
    B, D = rows.shape
    E = proj.shape[1]
    return pl.pallas_call(
        _final_kernel,
        out_shape=jax.ShapeDtypeStruct((B, E), rows.dtype),
        grid=(1,),
        in_specs=[pl.BlockSpec((B, D), lambda i: (0, 0)),
                  pl.BlockSpec((1, D), lambda i: (0, 0)),
                  pl.BlockSpec((1, D), lambda i: (0, 0)),
                  pl.BlockSpec((D, E), lambda i: (0, 0))],
        out_specs=pl.BlockSpec((B, E), lambda i: (0, 0)),
        compiler_params=pltpu.CompilerParams(dimension_semantics=("arbitrary",)),
    )(rows, ln_w, ln_b, proj)


# ----------------------------------------------------------------------------
# TextEncoder.forward
# ----------------------------------------------------------------------------
def text_encoder_forward(params, prompts, tokenized_prompts, num_heads):
    x = text_transformer(prompts, params, num_heads)         # pos-add fused in layer 0
    B = x.shape[0]
    eot = jnp.argmax(tokenized_prompts, axis=-1)              # CLIP: EOT has max token id
    rows = x[jnp.arange(B), eot]                              # (B, D) glue gather in JAX
    return final_projection(rows, params['lnf_w'], params['lnf_b'], params['proj'])


# ----------------------------------------------------------------------------
# Deterministic synthetic parameters.
# Layer weights are STACKED along a leading L axis; matmul weights stored
# pre-transposed (y = x @ W + b) and in bf16; LN params / biases in f32.
# ----------------------------------------------------------------------------
def init_params(key, *, depth, d_model, embed_dim, seq_len):
    D, E, L = d_model, embed_dim, depth
    ks = jax.random.split(key, 16)
    bf = jnp.bfloat16

    def nrm(k, shape, scale=0.02, dtype=jnp.float32):
        return (scale * jax.random.normal(k, shape)).astype(dtype)

    return dict(
        pos=nrm(ks[0], (seq_len, D), 0.01),
        ln1_w=1.0 + nrm(ks[1], (L, 1, D), 0.1),
        ln1_b=nrm(ks[2], (L, 1, D)),
        w_qkv=nrm(ks[3], (L, D, 3 * D), dtype=bf),
        b_qkv=nrm(ks[4], (L, 1, 3 * D)),
        w_o=nrm(ks[5], (L, D, D), dtype=bf),
        b_o=nrm(ks[6], (L, 1, D)),
        ln2_w=1.0 + nrm(ks[7], (L, 1, D), 0.1),
        ln2_b=nrm(ks[8], (L, 1, D)),
        w_fc=nrm(ks[9], (L, D, 4 * D), dtype=bf),
        b_fc=nrm(ks[10], (L, 1, 4 * D)),
        w_proj=nrm(ks[11], (L, 4 * D, D), dtype=bf),
        b_proj=nrm(ks[12], (L, 1, D)),
        lnf_w=1.0 + nrm(ks[13], (1, D), 0.1),
        lnf_b=nrm(ks[14], (1, D)),
        proj=nrm(ks[15], (D, E), dtype=bf),
    )


# ----------------------------------------------------------------------------
# Pure-JAX reference (same bf16-weight / f32-accumulate numerics)
# ----------------------------------------------------------------------------
def ref_forward(params, prompts, tokenized_prompts, num_heads):
    f32, bf16 = jnp.float32, jnp.bfloat16
    x = prompts.astype(f32) + params['pos'].astype(f32)
    B, S, D = x.shape
    H = num_heads
    dh = D // H
    L = params['w_qkv'].shape[0]
    causal = jnp.triu(jnp.ones((S, S), bool), 1)

    def ln(v, w, b):
        mu = v.mean(-1, keepdims=True)
        var = ((v - mu) ** 2).mean(-1, keepdims=True)
        return (v - mu) / jnp.sqrt(var + EPS) * w + b

    def mm(a, w):
        return jnp.dot(a.astype(bf16), w, preferred_element_type=f32)

    for l in range(L):
        h = ln(x, params['ln1_w'][l], params['ln1_b'][l])
        qkv = mm(h, params['w_qkv'][l]) + params['b_qkv'][l]
        q, k, v = jnp.split(qkv, 3, axis=-1)
        q = q.reshape(B, S, H, dh).transpose(0, 2, 1, 3)
        k = k.reshape(B, S, H, dh).transpose(0, 2, 1, 3)
        v = v.reshape(B, S, H, dh).transpose(0, 2, 1, 3)
        s = jnp.einsum('bhqd,bhkd->bhqk', q.astype(bf16), k.astype(bf16),
                       preferred_element_type=f32) / dh ** 0.5
        s = jnp.where(causal, -jnp.inf, s)
        a = jax.nn.softmax(s, axis=-1)
        o = jnp.einsum('bhqk,bhkd->bhqd', a.astype(bf16), v.astype(bf16),
                       preferred_element_type=f32)
        o = o.transpose(0, 2, 1, 3).reshape(B, S, D)
        x = x + mm(o, params['w_o'][l]) + params['b_o'][l]
        h2 = ln(x, params['ln2_w'][l], params['ln2_b'][l])
        h2 = mm(h2, params['w_fc'][l]) + params['b_fc'][l]
        h2 = h2 * jax.nn.sigmoid(1.702 * h2)
        x = x + mm(h2, params['w_proj'][l]) + params['b_proj'][l]

    eot = jnp.argmax(tokenized_prompts, axis=-1)
    rows = x[jnp.arange(B), eot]
    rows = ln(rows, params['lnf_w'], params['lnf_b'])
    return mm(rows, params['proj'])


if __name__ == "__main__":
    # batch, seq, width, heads, embed_dim, layers
    B, S, D, H, E, L = 4, 8, 32, 4, 32, 2

    key = jax.random.PRNGKey(0)
    kp, kt, kw = jax.random.split(key, 3)
    params = init_params(kw, depth=L, d_model=D, embed_dim=E, seq_len=S)

    prompts = jax.random.normal(kp, (B, S, D), jnp.float32)           # learned prompt embeddings
    tokenized_prompts = jax.random.randint(kt, (B, S), 0, 100).astype(jnp.int32)

    out = text_encoder_forward(params, prompts, tokenized_prompts, H)
    out = jax.block_until_ready(out)
    assert out.shape == (B, E)

    ref = ref_forward(params, prompts, tokenized_prompts, H)
    max_err = jnp.max(jnp.abs(out - ref))
    assert jnp.allclose(out, ref, atol=2e-3, rtol=2e-3), f"mismatch, max abs err {max_err}"

    print("KERNEL_OK")
</pallas_src>

<mosaic_0001>
module attributes {stable_mosaic.version = 11 : i64} {
  func.func @_transformer_kernel(%arg0: i32, %arg1: i32, %arg2: memref<2x8x32xf32, #tpu.memory_space<vmem>>, %arg3: memref<8x32xf32, #tpu.memory_space<vmem>>, %arg4: memref<1x1x32xf32, #tpu.memory_space<vmem>>, %arg5: memref<1x1x32xf32, #tpu.memory_space<vmem>>, %arg6: memref<1x32x96xbf16, #tpu.memory_space<vmem>>, %arg7: memref<1x1x96xf32, #tpu.memory_space<vmem>>, %arg8: memref<1x32x32xbf16, #tpu.memory_space<vmem>>, %arg9: memref<1x1x32xf32, #tpu.memory_space<vmem>>, %arg10: memref<1x1x32xf32, #tpu.memory_space<vmem>>, %arg11: memref<1x1x32xf32, #tpu.memory_space<vmem>>, %arg12: memref<1x32x128xbf16, #tpu.memory_space<vmem>>, %arg13: memref<1x1x128xf32, #tpu.memory_space<vmem>>, %arg14: memref<1x128x32xbf16, #tpu.memory_space<vmem>>, %arg15: memref<1x1x32xf32, #tpu.memory_space<vmem>>, %arg16: memref<2x8x32xf32, #tpu.memory_space<vmem>>, %arg17: memref<2x8x32xf32, #tpu.memory_space<vmem>>, %arg18: memref<2x8x32xf32, #tpu.memory_space<vmem>>) attributes {dimension_semantics = [#tpu.dimension_semantics<parallel>, #tpu.dimension_semantics<arbitrary>], iteration_bounds = array<i64: 2, 2>, scalar_prefetch = 0 : i64, scratch_operands = 2 : i64, tpu.core_type = #tpu.core_type<tc>, window_params = [{transform_indices = @transform_0, window_bounds = array<i64: 2, 8, 32>}, {pipeline_mode = #tpu.pipeline_mode<synchronous>, transform_indices = @transform_1, window_bounds = array<i64: 8, 32>}, {transform_indices = @transform_2, window_bounds = array<i64: 1, 1, 32>}, {transform_indices = @transform_3, window_bounds = array<i64: 1, 1, 32>}, {transform_indices = @transform_4, window_bounds = array<i64: 1, 32, 96>}, {transform_indices = @transform_5, window_bounds = array<i64: 1, 1, 96>}, {transform_indices = @transform_6, window_bounds = array<i64: 1, 32, 32>}, {transform_indices = @transform_7, window_bounds = array<i64: 1, 1, 32>}, {transform_indices = @transform_8, window_bounds = array<i64: 1, 1, 32>}, {transform_indices = @transform_9, window_bounds = array<i64: 1, 1, 32>}, {transform_indices = @transform_10, window_bounds = array<i64: 1, 32, 128>}, {transform_indices = @transform_11, window_bounds = array<i64: 1, 1, 128>}, {transform_indices = @transform_12, window_bounds = array<i64: 1, 128, 32>}, {transform_indices = @transform_13, window_bounds = array<i64: 1, 1, 32>}, {transform_indices = @transform_14, window_bounds = array<i64: 2, 8, 32>}]} {
    %c0_i32 = arith.constant 0 : i32
    %0 = arith.cmpi eq, %arg1, %c0_i32 : i32
    %1 = arith.extui %0 : i1 to i32
    %c0_i32_0 = arith.constant 0 : i32
    %2 = arith.cmpi ne, %1, %c0_i32_0 : i32
    scf.if %2 {
      %c0_94 = arith.constant 0 : index
      %c0_95 = arith.constant 0 : index
      %c0_96 = arith.constant 0 : index
      %211 = vector.load %arg2[%c0_94, %c0_95, %c0_96] : memref<2x8x32xf32, #tpu.memory_space<vmem>>, vector<2x8x32xf32>
      %c0_97 = arith.constant 0 : index
      %c0_98 = arith.constant 0 : index
      %212 = vector.load %arg3[%c0_97, %c0_98] : memref<8x32xf32, #tpu.memory_space<vmem>>, vector<8x32xf32>
      %213 = vector.shape_cast %212 : vector<8x32xf32> to vector<1x8x32xf32>
      %214 = vector.broadcast %213 : vector<1x8x32xf32> to vector<2x8x32xf32>
      %215 = arith.addf %211, %214 : vector<2x8x32xf32>
      %c0_99 = arith.constant 0 : index
      %c0_100 = arith.constant 0 : index
      %c0_101 = arith.constant 0 : index
      %216 = vector.load %arg17[%c0_99, %c0_100, %c0_101] : memref<2x8x32xf32, #tpu.memory_space<vmem>>, vector<2x8x32xf32>
      tpu.vector_store %arg17[%c0_99, %c0_100, %c0_101], %215 {strides = array<i32>} : memref<2x8x32xf32, #tpu.memory_space<vmem>>, vector<2x8x32xf32>,
    } else {
    }
    %c0 = arith.constant 0 : index
    %c0_1 = arith.constant 0 : index
    %c0_2 = arith.constant 0 : index
    %3 = vector.load %arg17[%c0, %c0_1, %c0_2] : memref<2x8x32xf32, #tpu.memory_space<vmem>>, vector<2x8x32xf32>
    %4 = vector.shape_cast %3 : vector<2x8x32xf32> to vector<16x32xf32>
    %c0_3 = arith.constant 0 : index
    %c0_4 = arith.constant 0 : index
    %c0_5 = arith.constant 0 : index
    %5 = vector.load %arg4[%c0_3, %c0_4, %c0_5] : memref<1x1x32xf32, #tpu.memory_space<vmem>>, vector<1x1x32xf32>
    %6 = vector.shape_cast %5 : vector<1x1x32xf32> to vector<1x32xf32>
    %c0_6 = arith.constant 0 : index
    %c0_7 = arith.constant 0 : index
    %c0_8 = arith.constant 0 : index
    %7 = vector.load %arg5[%c0_6, %c0_7, %c0_8] : memref<1x1x32xf32, #tpu.memory_space<vmem>>, vector<1x1x32xf32>
    %8 = vector.shape_cast %7 : vector<1x1x32xf32> to vector<1x32xf32>
    %cst = arith.constant dense<0.000000e+00> : vector<16xf32>
    %9 = vector.multi_reduction <add>, %4, %cst [1] : vector<16x32xf32> to vector<16xf32>
    %10 = vector.shape_cast %9 : vector<16xf32> to vector<16x1xf32>
    %cst_9 = arith.constant 3.200000e+01 : f32
    %11 = vector.broadcast %cst_9 : f32 to vector<16x1xf32>
    %12 = arith.divf %10, %11 : vector<16x1xf32>
    %13 = vector.broadcast %12 : vector<16x1xf32> to vector<16x32xf32>
    %14 = arith.subf %4, %13 : vector<16x32xf32>
    %15 = arith.mulf %14, %14 : vector<16x32xf32>
    %cst_10 = arith.constant dense<0.000000e+00> : vector<16xf32>
    %16 = vector.multi_reduction <add>, %15, %cst_10 [1] : vector<16x32xf32> to vector<16xf32>
    %17 = vector.shape_cast %16 : vector<16xf32> to vector<16x1xf32>
    %cst_11 = arith.constant 3.200000e+01 : f32
    %18 = vector.broadcast %cst_11 : f32 to vector<16x1xf32>
    %19 = arith.divf %17, %18 : vector<16x1xf32>
    %20 = vector.broadcast %12 : vector<16x1xf32> to vector<16x32xf32>
    %21 = arith.subf %4, %20 : vector<16x32xf32>
    %cst_12 = arith.constant 9.99999974E-6 : f32
    %22 = vector.broadcast %cst_12 : f32 to vector<16x1xf32>
    %23 = arith.addf %19, %22 : vector<16x1xf32>
    %24 = math.rsqrt %23 : vector<16x1xf32>
    %25 = vector.broadcast %24 : vector<16x1xf32> to vector<16x32xf32>
    %26 = arith.mulf %21, %25 : vector<16x32xf32>
    %27 = vector.broadcast %6 : vector<1x32xf32> to vector<16x32xf32>
    %28 = arith.mulf %26, %27 : vector<16x32xf32>
    %29 = vector.broadcast %8 : vector<1x32xf32> to vector<16x32xf32>
    %30 = arith.addf %28, %29 : vector<16x32xf32>
    %31 = arith.truncf %30 : vector<16x32xf32> to vector<16x32xbf16>
    %c0_13 = arith.constant 0 : index
    %c0_14 = arith.constant 0 : index
    %c0_15 = arith.constant 0 : index
    %32 = vector.load %arg6[%c0_13, %c0_14, %c0_15] : memref<1x32x96xbf16, #tpu.memory_space<vmem>>, vector<1x32x96xbf16>
    %33 = vector.shape_cast %32 : vector<1x32x96xbf16> to vector<32x96xbf16>
    %cst_16 = arith.constant dense<0.000000e+00> : vector<16x96xf32>
    %34 = tpu.matmul %31, %33, %cst_16 {dimension_numbers = #tpu.dot_dimension_numbers<[1], [0], [0], [1], [0, 0, 1, 1], [], []>} : vector<16x32xbf16>, vector<32x96xbf16>, vector<16x96xf32> -> vector<16x96xf32>
    %c0_17 = arith.constant 0 : index
    %c0_18 = arith.constant 0 : index
    %c0_19 = arith.constant 0 : index
    %35 = vector.load %arg7[%c0_17, %c0_18, %c0_19] : memref<1x1x96xf32, #tpu.memory_space<vmem>>, vector<1x1x96xf32>
    %36 = vector.shape_cast %35 : vector<1x1x96xf32> to vector<1x96xf32>
    %37 = vector.broadcast %36 : vector<1x96xf32> to vector<16x96xf32>
    %38 = arith.addf %34, %37 : vector<16x96xf32>
    %39 = vector.extract_strided_slice %38 {offsets = [0, 0], sizes = [16, 32], strides = [1, 1]} : vector<16x96xf32> to vector<16x32xf32>
    %40 = vector.shape_cast %39 : vector<16x32xf32> to vector<2x8x32xf32>
    %41 = vector.extract_strided_slice %38 {offsets = [0, 32], sizes = [16, 32], strides = [1, 1]} : vector<16x96xf32> to vector<16x32xf32>
    %42 = vector.shape_cast %41 : vector<16x32xf32> to vector<2x8x32xf32>
    %43 = vector.extract_strided_slice %38 {offsets = [0, 64], sizes = [16, 32], strides = [1, 1]} : vector<16x96xf32> to vector<16x32xf32>
    %44 = vector.shape_cast %43 : vector<16x32xf32> to vector<2x8x32xf32>
    %45 = tpu.iota {dimensions = array<i32: 1>} : vector<2x8x8xi32>
    %46 = tpu.iota {dimensions = array<i32: 2>} : vector<2x8x8xi32>
    %47 = arith.cmpi sgt, %46, %45 : vector<2x8x8xi32>
    %48 = vector.extract_strided_slice %40 {offsets = [0, 0, 0], sizes = [2, 8, 8], strides = [1, 1, 1]} : vector<2x8x32xf32> to vector<2x8x8xf32>
    %49 = arith.truncf %48 : vector<2x8x8xf32> to vector<2x8x8xbf16>
    %50 = vector.extract_strided_slice %42 {offsets = [0, 0, 0], sizes = [2, 8, 8], strides = [1, 1, 1]} : vector<2x8x32xf32> to vector<2x8x8xf32>
    %51 = arith.truncf %50 : vector<2x8x8xf32> to vector<2x8x8xbf16>
    %52 = vector.extract_strided_slice %44 {offsets = [0, 0, 0], sizes = [2, 8, 8], strides = [1, 1, 1]} : vector<2x8x32xf32> to vector<2x8x8xf32>
    %53 = arith.truncf %52 : vector<2x8x8xf32> to vector<2x8x8xbf16>
    "tpu.trace_start"() <{level = 10 : i32, message = "bqd,bkd->bqk"}> : () -> ()
    %cst_20 = arith.constant dense<0.000000e+00> : vector<2x8x8xf32>
    %54 = tpu.matmul %49, %51, %cst_20 {dimension_numbers = #tpu.dot_dimension_numbers<[2], [2], [1], [1], [0, 0, 0, 1, 1, 1], [0], [0]>} : vector<2x8x8xbf16>, vector<2x8x8xbf16>, vector<2x8x8xf32> -> vector<2x8x8xf32>
    "tpu.trace_stop"() : () -> ()
    %cst_21 = arith.constant 0.353553385 : f32
    %55 = vector.broadcast %cst_21 : f32 to vector<2x8x8xf32>
    %56 = arith.mulf %54, %55 : vector<2x8x8xf32>
    %cst_22 = arith.constant -3.40282347E+38 : f32
    %57 = vector.broadcast %cst_22 : f32 to vector<2x8x8xf32>
    %58 = arith.select %47, %57, %56 : vector<2x8x8xi1>, vector<2x8x8xf32>
    %cst_23 = arith.constant dense<0xFF800000> : vector<2x8xf32>
    %59 = vector.multi_reduction <maximumf>, %58, %cst_23 [2] : vector<2x8x8xf32> to vector<2x8xf32>
    %60 = vector.shape_cast %59 : vector<2x8xf32> to vector<2x8x1xf32>
    %61 = vector.broadcast %60 : vector<2x8x1xf32> to vector<2x8x8xf32>
    %62 = arith.subf %58, %61 : vector<2x8x8xf32>
    %63 = math.exp %62 : vector<2x8x8xf32>
    %cst_24 = arith.constant dense<0.000000e+00> : vector<2x8xf32>
    %64 = vector.multi_reduction <add>, %63, %cst_24 [2] : vector<2x8x8xf32> to vector<2x8xf32>
    %65 = vector.shape_cast %64 : vector<2x8xf32> to vector<2x8x1xf32>
    %66 = tpu.reciprocal %65 {approx = true} : vector<2x8x1xf32> -> vector<2x8x1xf32>
    %67 = vector.broadcast %66 : vector<2x8x1xf32> to vector<2x8x8xf32>
    %68 = arith.mulf %63, %67 : vector<2x8x8xf32>
    %69 = arith.truncf %68 : vector<2x8x8xf32> to vector<2x8x8xbf16>
    "tpu.trace_start"() <{level = 10 : i32, message = "bqk,bkd->bqd"}> : () -> ()
    %cst_25 = arith.constant dense<0.000000e+00> : vector<2x8x8xf32>
    %70 = tpu.matmul %69, %53, %cst_25 {dimension_numbers = #tpu.dot_dimension_numbers<[2], [1], [1], [2], [0, 0, 0, 1, 1, 2], [0], [0]>} : vector<2x8x8xbf16>, vector<2x8x8xbf16>, vector<2x8x8xf32> -> vector<2x8x8xf32>
    "tpu.trace_stop"() : () -> ()
    %c0_26 = arith.constant 0 : index
    %c0_27 = arith.constant 0 : index
    %c0_28 = arith.constant 0 : index
    %71 = vector.load %arg18[%c0_26, %c0_27, %c0_28] : memref<2x8x32xf32, #tpu.memory_space<vmem>>, vector<2x8x8xf32>
    tpu.vector_store %arg18[%c0_26, %c0_27, %c0_28], %70 {strides = array<i32>} : memref<2x8x32xf32, #tpu.memory_space<vmem>>, vector<2x8x8xf32>,
    %72 = vector.extract_strided_slice %40 {offsets = [0, 0, 8], sizes = [2, 8, 8], strides = [1, 1, 1]} : vector<2x8x32xf32> to vector<2x8x8xf32>
    %73 = arith.truncf %72 : vector<2x8x8xf32> to vector<2x8x8xbf16>
    %74 = vector.extract_strided_slice %42 {offsets = [0, 0, 8], sizes = [2, 8, 8], strides = [1, 1, 1]} : vector<2x8x32xf32> to vector<2x8x8xf32>
    %75 = arith.truncf %74 : vector<2x8x8xf32> to vector<2x8x8xbf16>
    %76 = vector.extract_strided_slice %44 {offsets = [0, 0, 8], sizes = [2, 8, 8], strides = [1, 1, 1]} : vector<2x8x32xf32> to vector<2x8x8xf32>
    %77 = arith.truncf %76 : vector<2x8x8xf32> to vector<2x8x8xbf16>
    "tpu.trace_start"() <{level = 10 : i32, message = "bqd,bkd->bqk"}> : () -> ()
    %cst_29 = arith.constant dense<0.000000e+00> : vector<2x8x8xf32>
    %78 = tpu.matmul %73, %75, %cst_29 {dimension_numbers = #tpu.dot_dimension_numbers<[2], [2], [1], [1], [0, 0, 0, 1, 1, 1], [0], [0]>} : vector<2x8x8xbf16>, vector<2x8x8xbf16>, vector<2x8x8xf32> -> vector<2x8x8xf32>
    "tpu.trace_stop"() : () -> ()
    %cst_30 = arith.constant 0.353553385 : f32
    %79 = vector.broadcast %cst_30 : f32 to vector<2x8x8xf32>
    %80 = arith.mulf %78, %79 : vector<2x8x8xf32>
    %cst_31 = arith.constant -3.40282347E+38 : f32
    %81 = vector.broadcast %cst_31 : f32 to vector<2x8x8xf32>
    %82 = arith.select %47, %81, %80 : vector<2x8x8xi1>, vector<2x8x8xf32>
    %cst_32 = arith.constant dense<0xFF800000> : vector<2x8xf32>
    %83 = vector.multi_reduction <maximumf>, %82, %cst_32 [2] : vector<2x8x8xf32> to vector<2x8xf32>
    %84 = vector.shape_cast %83 : vector<2x8xf32> to vector<2x8x1xf32>
    %85 = vector.broadcast %84 : vector<2x8x1xf32> to vector<2x8x8xf32>
    %86 = arith.subf %82, %85 : vector<2x8x8xf32>
    %87 = math.exp %86 : vector<2x8x8xf32>
    %cst_33 = arith.constant dense<0.000000e+00> : vector<2x8xf32>
    %88 = vector.multi_reduction <add>, %87, %cst_33 [2] : vector<2x8x8xf32> to vector<2x8xf32>
    %89 = vector.shape_cast %88 : vector<2x8xf32> to vector<2x8x1xf32>
    %90 = tpu.reciprocal %89 {approx = true} : vector<2x8x1xf32> -> vector<2x8x1xf32>
    %91 = vector.broadcast %90 : vector<2x8x1xf32> to vector<2x8x8xf32>
    %92 = arith.mulf %87, %91 : vector<2x8x8xf32>
    %93 = arith.truncf %92 : vector<2x8x8xf32> to vector<2x8x8xbf16>
    "tpu.trace_start"() <{level = 10 : i32, message = "bqk,bkd->bqd"}> : () -> ()
    %cst_34 = arith.constant dense<0.000000e+00> : vector<2x8x8xf32>
    %94 = tpu.matmul %93, %77, %cst_34 {dimension_numbers = #tpu.dot_dimension_numbers<[2], [1], [1], [2], [0, 0, 0, 1, 1, 2], [0], [0]>} : vector<2x8x8xbf16>, vector<2x8x8xbf16>, vector<2x8x8xf32> -> vector<2x8x8xf32>
    "tpu.trace_stop"() : () -> ()
    %c0_35 = arith.constant 0 : index
    %c0_36 = arith.constant 0 : index
    %c8 = arith.constant 8 : index
    %95 = vector.load %arg18[%c0_35, %c0_36, %c8] : memref<2x8x32xf32, #tpu.memory_space<vmem>>, vector<2x8x8xf32>
    tpu.vector_store %arg18[%c0_35, %c0_36, %c8], %94 {strides = array<i32>} : memref<2x8x32xf32, #tpu.memory_space<vmem>>, vector<2x8x8xf32>,
    %96 = vector.extract_strided_slice %40 {offsets = [0, 0, 16], sizes = [2, 8, 8], strides = [1, 1, 1]} : vector<2x8x32xf32> to vector<2x8x8xf32>
    %97 = arith.truncf %96 : vector<2x8x8xf32> to vector<2x8x8xbf16>
    %98 = vector.extract_strided_slice %42 {offsets = [0, 0, 16], sizes = [2, 8, 8], strides = [1, 1, 1]} : vector<2x8x32xf32> to vector<2x8x8xf32>
    %99 = arith.truncf %98 : vector<2x8x8xf32> to vector<2x8x8xbf16>
    %100 = vector.extract_strided_slice %44 {offsets = [0, 0, 16], sizes = [2, 8, 8], strides = [1, 1, 1]} : vector<2x8x32xf32> to vector<2x8x8xf32>
    %101 = arith.truncf %100 : vector<2x8x8xf32> to vector<2x8x8xbf16>
    "tpu.trace_start"() <{level = 10 : i32, message = "bqd,bkd->bqk"}> : () -> ()
    %cst_37 = arith.constant dense<0.000000e+00> : vector<2x8x8xf32>
    %102 = tpu.matmul %97, %99, %cst_37 {dimension_numbers = #tpu.dot_dimension_numbers<[2], [2], [1], [1], [0, 0, 0, 1, 1, 1], [0], [0]>} : vector<2x8x8xbf16>, vector<2x8x8xbf16>, vector<2x8x8xf32> -> vector<2x8x8xf32>
    "tpu.trace_stop"() : () -> ()
    %cst_38 = arith.constant 0.353553385 : f32
    %103 = vector.broadcast %cst_38 : f32 to vector<2x8x8xf32>
    %104 = arith.mulf %102, %103 : vector<2x8x8xf32>
    %cst_39 = arith.constant -3.40282347E+38 : f32
    %105 = vector.broadcast %cst_39 : f32 to vector<2x8x8xf32>
    %106 = arith.select %47, %105, %104 : vector<2x8x8xi1>, vector<2x8x8xf32>
    %cst_40 = arith.constant dense<0xFF800000> : vector<2x8xf32>
    %107 = vector.multi_reduction <maximumf>, %106, %cst_40 [2] : vector<2x8x8xf32> to vector<2x8xf32>
    %108 = vector.shape_cast %107 : vector<2x8xf32> to vector<2x8x1xf32>
    %109 = vector.broadcast %108 : vector<2x8x1xf32> to vector<2x8x8xf32>
    %110 = arith.subf %106, %109 : vector<2x8x8xf32>
    %111 = math.exp %110 : vector<2x8x8xf32>
    %cst_41 = arith.constant dense<0.000000e+00> : vector<2x8xf32>
    %112 = vector.multi_reduction <add>, %111, %cst_41 [2] : vector<2x8x8xf32> to vector<2x8xf32>
    %113 = vector.shape_cast %112 : vector<2x8xf32> to vector<2x8x1xf32>
    %114 = tpu.reciprocal %113 {approx = true} : vector<2x8x1xf32> -> vector<2x8x1xf32>
    %115 = vector.broadcast %114 : vector<2x8x1xf32> to vector<2x8x8xf32>
    %116 = arith.mulf %111, %115 : vector<2x8x8xf32>
    %117 = arith.truncf %116 : vector<2x8x8xf32> to vector<2x8x8xbf16>
    "tpu.trace_start"() <{level = 10 : i32, message = "bqk,bkd->bqd"}> : () -> ()
    %cst_42 = arith.constant dense<0.000000e+00> : vector<2x8x8xf32>
    %118 = tpu.matmul %117, %101, %cst_42 {dimension_numbers = #tpu.dot_dimension_numbers<[2], [1], [1], [2], [0, 0, 0, 1, 1, 2], [0], [0]>} : vector<2x8x8xbf16>, vector<2x8x8xbf16>, vector<2x8x8xf32> -> vector<2x8x8xf32>
    "tpu.trace_stop"() : () -> ()
    %c0_43 = arith.constant 0 : index
    %c0_44 = arith.constant 0 : index
    %c16 = arith.constant 16 : index
    %119 = vector.load %arg18[%c0_43, %c0_44, %c16] : memref<2x8x32xf32, #tpu.memory_space<vmem>>, vector<2x8x8xf32>
    tpu.vector_store %arg18[%c0_43, %c0_44, %c16], %118 {strides = array<i32>} : memref<2x8x32xf32, #tpu.memory_space<vmem>>, vector<2x8x8xf32>,
    %120 = vector.extract_strided_slice %40 {offsets = [0, 0, 24], sizes = [2, 8, 8], strides = [1, 1, 1]} : vector<2x8x32xf32> to vector<2x8x8xf32>
    %121 = arith.truncf %120 : vector<2x8x8xf32> to vector<2x8x8xbf16>
    %122 = vector.extract_strided_slice %42 {offsets = [0, 0, 24], sizes = [2, 8, 8], strides = [1, 1, 1]} : vector<2x8x32xf32> to vector<2x8x8xf32>
    %123 = arith.truncf %122 : vector<2x8x8xf32> to vector<2x8x8xbf16>
    %124 = vector.extract_strided_slice %44 {offsets = [0, 0, 24], sizes = [2, 8, 8], strides = [1, 1, 1]} : vector<2x8x32xf32> to vector<2x8x8xf32>
    %125 = arith.truncf %124 : vector<2x8x8xf32> to vector<2x8x8xbf16>
    "tpu.trace_start"() <{level = 10 : i32, message = "bqd,bkd->bqk"}> : () -> ()
    %cst_45 = arith.constant dense<0.000000e+00> : vector<2x8x8xf32>
    %126 = tpu.matmul %121, %123, %cst_45 {dimension_numbers = #tpu.dot_dimension_numbers<[2], [2], [1], [1], [0, 0, 0, 1, 1, 1], [0], [0]>} : vector<2x8x8xbf16>, vector<2x8x8xbf16>, vector<2x8x8xf32> -> vector<2x8x8xf32>
    "tpu.trace_stop"() : () -> ()
    %cst_46 = arith.constant 0.353553385 : f32
    %127 = vector.broadcast %cst_46 : f32 to vector<2x8x8xf32>
    %128 = arith.mulf %126, %127 : vector<2x8x8xf32>
    %cst_47 = arith.constant -3.40282347E+38 : f32
    %129 = vector.broadcast %cst_47 : f32 to vector<2x8x8xf32>
    %130 = arith.select %47, %129, %128 : vector<2x8x8xi1>, vector<2x8x8xf32>
    %cst_48 = arith.constant dense<0xFF800000> : vector<2x8xf32>
    %131 = vector.multi_reduction <maximumf>, %130, %cst_48 [2] : vector<2x8x8xf32> to vector<2x8xf32>
    %132 = vector.shape_cast %131 : vector<2x8xf32> to vector<2x8x1xf32>
    %133 = vector.broadcast %132 : vector<2x8x1xf32> to vector<2x8x8xf32>
    %134 = arith.subf %130, %133 : vector<2x8x8xf32>
    %135 = math.exp %134 : vector<2x8x8xf32>
    %cst_49 = arith.constant dense<0.000000e+00> : vector<2x8xf32>
    %136 = vector.multi_reduction <add>, %135, %cst_49 [2] : vector<2x8x8xf32> to vector<2x8xf32>
    %137 = vector.shape_cast %136 : vector<2x8xf32> to vector<2x8x1xf32>
    %138 = tpu.reciprocal %137 {approx = true} : vector<2x8x1xf32> -> vector<2x8x1xf32>
    %139 = vector.broadcast %138 : vector<2x8x1xf32> to vector<2x8x8xf32>
    %140 = arith.mulf %135, %139 : vector<2x8x8xf32>
    %141 = arith.truncf %140 : vector<2x8x8xf32> to vector<2x8x8xbf16>
    "tpu.trace_start"() <{level = 10 : i32, message = "bqk,bkd->bqd"}> : () -> ()
    %cst_50 = arith.constant dense<0.000000e+00> : vector<2x8x8xf32>
    %142 = tpu.matmul %141, %125, %cst_50 {dimension_numbers = #tpu.dot_dimension_numbers<[2], [1], [1], [2], [0, 0, 0, 1, 1, 2], [0], [0]>} : vector<2x8x8xbf16>, vector<2x8x8xbf16>, vector<2x8x8xf32> -> vector<2x8x8xf32>
    "tpu.trace_stop"() : () -> ()
    %c0_51 = arith.constant 0 : index
    %c0_52 = arith.constant 0 : index
    %c24 = arith.constant 24 : index
    %143 = vector.load %arg18[%c0_51, %c0_52, %c24] : memref<2x8x32xf32, #tpu.memory_space<vmem>>, vector<2x8x8xf32>
    tpu.vector_store %arg18[%c0_51, %c0_52, %c24], %142 {strides = array<i32>} : memref<2x8x32xf32, #tpu.memory_space<vmem>>, vector<2x8x8xf32>,
    %c0_53 = arith.constant 0 : index
    %c0_54 = arith.constant 0 : index
    %c0_55 = arith.constant 0 : index
    %144 = vector.load %arg18[%c0_53, %c0_54, %c0_55] : memref<2x8x32xf32, #tpu.memory_space<vmem>>, vector<2x8x32xf32>
    %145 = vector.shape_cast %144 : vector<2x8x32xf32> to vector<16x32xf32>
    %146 = arith.truncf %145 : vector<16x32xf32> to vector<16x32xbf16>
    %c0_56 = arith.constant 0 : index
    %c0_57 = arith.constant 0 : index
    %c0_58 = arith.constant 0 : index
    %147 = vector.load %arg8[%c0_56, %c0_57, %c0_58] : memref<1x32x32xbf16, #tpu.memory_space<vmem>>, vector<1x32x32xbf16>
    %148 = vector.shape_cast %147 : vector<1x32x32xbf16> to vector<32x32xbf16>
    %cst_59 = arith.constant dense<0.000000e+00> : vector<16x32xf32>
    %149 = tpu.matmul %146, %148, %cst_59 {dimension_numbers = #tpu.dot_dimension_numbers<[1], [0], [0], [1], [0, 0, 1, 1], [], []>} : vector<16x32xbf16>, vector<32x32xbf16>, vector<16x32xf32> -> vector<16x32xf32>
    %c0_60 = arith.constant 0 : index
    %c0_61 = arith.constant 0 : index
    %c0_62 = arith.constant 0 : index
    %150 = vector.load %arg9[%c0_60, %c0_61, %c0_62] : memref<1x1x32xf32, #tpu.memory_space<vmem>>, vector<1x1x32xf32>
    %151 = vector.shape_cast %150 : vector<1x1x32xf32> to vector<1x32xf32>
    %152 = vector.broadcast %151 : vector<1x32xf32> to vector<16x32xf32>
    %153 = arith.addf %149, %152 : vector<16x32xf32>
    %154 = arith.addf %4, %153 : vector<16x32xf32>
    %c0_63 = arith.constant 0 : index
    %c0_64 = arith.constant 0 : index
    %c0_65 = arith.constant 0 : index
    %155 = vector.load %arg10[%c0_63, %c0_64, %c0_65] : memref<1x1x32xf32, #tpu.memory_space<vmem>>, vector<1x1x32xf32>
    %156 = vector.shape_cast %155 : vector<1x1x32xf32> to vector<1x32xf32>
    %c0_66 = arith.constant 0 : index
    %c0_67 = arith.constant 0 : index
    %c0_68 = arith.constant 0 : index
    %157 = vector.load %arg11[%c0_66, %c0_67, %c0_68] : memref<1x1x32xf32, #tpu.memory_space<vmem>>, vector<1x1x32xf32>
    %158 = vector.shape_cast %157 : vector<1x1x32xf32> to vector<1x32xf32>
    %cst_69 = arith.constant dense<0.000000e+00> : vector<16xf32>
    %159 = vector.multi_reduction <add>, %154, %cst_69 [1] : vector<16x32xf32> to vector<16xf32>
    %160 = vector.shape_cast %159 : vector<16xf32> to vector<16x1xf32>
    %cst_70 = arith.constant 3.200000e+01 : f32
    %161 = vector.broadcast %cst_70 : f32 to vector<16x1xf32>
    %162 = arith.divf %160, %161 : vector<16x1xf32>
    %163 = vector.broadcast %162 : vector<16x1xf32> to vector<16x32xf32>
    %164 = arith.subf %154, %163 : vector<16x32xf32>
    %165 = arith.mulf %164, %164 : vector<16x32xf32>
    %cst_71 = arith.constant dense<0.000000e+00> : vector<16xf32>
    %166 = vector.multi_reduction <add>, %165, %cst_71 [1] : vector<16x32xf32> to vector<16xf32>
    %167 = vector.shape_cast %166 : vector<16xf32> to vector<16x1xf32>
    %cst_72 = arith.constant 3.200000e+01 : f32
    %168 = vector.broadcast %cst_72 : f32 to vector<16x1xf32>
    %169 = arith.divf %167, %168 : vector<16x1xf32>
    %170 = vector.broadcast %162 : vector<16x1xf32> to vector<16x32xf32>
    %171 = arith.subf %154, %170 : vector<16x32xf32>
    %cst_73 = arith.constant 9.99999974E-6 : f32
    %172 = vector.broadcast %cst_73 : f32 to vector<16x1xf32>
    %173 = arith.addf %169, %172 : vector<16x1xf32>
    %174 = math.rsqrt %173 : vector<16x1xf32>
    %175 = vector.broadcast %174 : vector<16x1xf32> to vector<16x32xf32>
    %176 = arith.mulf %171, %175 : vector<16x32xf32>
    %177 = vector.broadcast %156 : vector<1x32xf32> to vector<16x32xf32>
    %178 = arith.mulf %176, %177 : vector<16x32xf32>
    %179 = vector.broadcast %158 : vector<1x32xf32> to vector<16x32xf32>
    %180 = arith.addf %178, %179 : vector<16x32xf32>
    %181 = arith.truncf %180 : vector<16x32xf32> to vector<16x32xbf16>
    %c0_74 = arith.constant 0 : index
    %c0_75 = arith.constant 0 : index
    %c0_76 = arith.constant 0 : index
    %182 = vector.load %arg12[%c0_74, %c0_75, %c0_76] : memref<1x32x128xbf16, #tpu.memory_space<vmem>>, vector<1x32x128xbf16>
    %183 = vector.shape_cast %182 : vector<1x32x128xbf16> to vector<32x128xbf16>
    %cst_77 = arith.constant dense<0.000000e+00> : vector<16x128xf32>
    %184 = tpu.matmul %181, %183, %cst_77 {dimension_numbers = #tpu.dot_dimension_numbers<[1], [0], [0], [1], [0, 0, 1, 1], [], []>} : vector<16x32xbf16>, vector<32x128xbf16>, vector<16x128xf32> -> vector<16x128xf32>
    %c0_78 = arith.constant 0 : index
    %c0_79 = arith.constant 0 : index
    %c0_80 = arith.constant 0 : index
    %185 = vector.load %arg13[%c0_78, %c0_79, %c0_80] : memref<1x1x128xf32, #tpu.memory_space<vmem>>, vector<1x1x128xf32>
    %186 = vector.shape_cast %185 : vector<1x1x128xf32> to vector<1x128xf32>
    %187 = vector.broadcast %186 : vector<1x128xf32> to vector<16x128xf32>
    %188 = arith.addf %184, %187 : vector<16x128xf32>
    %cst_81 = arith.constant 1.702000e+00 : f32
    %189 = vector.broadcast %cst_81 : f32 to vector<16x128xf32>
    %190 = arith.mulf %189, %188 : vector<16x128xf32>
    %191 = arith.negf %190 : vector<16x128xf32>
    %192 = math.exp %191 : vector<16x128xf32>
    %cst_82 = arith.constant 1.000000e+00 : f32
    %193 = vector.broadcast %cst_82 : f32 to vector<16x128xf32>
    %194 = arith.addf %193, %192 : vector<16x128xf32>
    %195 = arith.divf %193, %194 : vector<16x128xf32>
    %196 = arith.mulf %188, %195 : vector<16x128xf32>
    %197 = arith.truncf %196 : vector<16x128xf32> to vector<16x128xbf16>
    %c0_83 = arith.constant 0 : index
    %c0_84 = arith.constant 0 : index
    %c0_85 = arith.constant 0 : index
    %198 = vector.load %arg14[%c0_83, %c0_84, %c0_85] : memref<1x128x32xbf16, #tpu.memory_space<vmem>>, vector<1x128x32xbf16>
    %199 = vector.shape_cast %198 : vector<1x128x32xbf16> to vector<128x32xbf16>
    %cst_86 = arith.constant dense<0.000000e+00> : vector<16x32xf32>
    %200 = tpu.matmul %197, %199, %cst_86 {dimension_numbers = #tpu.dot_dimension_numbers<[1], [0], [0], [1], [0, 0, 1, 1], [], []>} : vector<16x128xbf16>, vector<128x32xbf16>, vector<16x32xf32> -> vector<16x32xf32>
    %c0_87 = arith.constant 0 : index
    %c0_88 = arith.constant 0 : index
    %c0_89 = arith.constant 0 : index
    %201 = vector.load %arg15[%c0_87, %c0_88, %c0_89] : memref<1x1x32xf32, #tpu.memory_space<vmem>>, vector<1x1x32xf32>
    %202 = vector.shape_cast %201 : vector<1x1x32xf32> to vector<1x32xf32>
    %203 = vector.broadcast %202 : vector<1x32xf32> to vector<16x32xf32>
    %204 = arith.addf %200, %203 : vector<16x32xf32>
    %205 = arith.addf %154, %204 : vector<16x32xf32>
    %206 = vector.shape_cast %205 : vector<16x32xf32> to vector<2x8x32xf32>
    %c0_90 = arith.constant 0 : index
    %c0_91 = arith.constant 0 : index
    %c0_92 = arith.constant 0 : index
    %207 = vector.load %arg17[%c0_90, %c0_91, %c0_92] : memref<2x8x32xf32, #tpu.memory_space<vmem>>, vector<2x8x32xf32>
    tpu.vector_store %arg17[%c0_90, %c0_91, %c0_92], %206 {strides = array<i32>} : memref<2x8x32xf32, #tpu.memory_space<vmem>>, vector<2x8x32xf32>,
    %c1_i32 = arith.constant 1 : i32
    %208 = arith.cmpi eq, %arg1, %c1_i32 : i32
    %209 = arith.extui %208 : i1 to i32
    %c0_i32_93 = arith.constant 0 : i32
    %210 = arith.cmpi ne, %209, %c0_i32_93 : i32
    scf.if %210 {
      %c0_94 = arith.constant 0 : index
      %c0_95 = arith.constant 0 : index
      %c0_96 = arith.constant 0 : index
      %211 = vector.load %arg17[%c0_94, %c0_95, %c0_96] : memref<2x8x32xf32, #tpu.memory_space<vmem>>, vector<2x8x32xf32>
      %c0_97 = arith.constant 0 : index
      %c0_98 = arith.constant 0 : index
      %c0_99 = arith.constant 0 : index
      %212 = vector.load %arg16[%c0_97, %c0_98, %c0_99] : memref<2x8x32xf32, #tpu.memory_space<vmem>>, vector<2x8x32xf32>
      tpu.vector_store %arg16[%c0_97, %c0_98, %c0_99], %211 {strides = array<i32>} : memref<2x8x32xf32, #tpu.memory_space<vmem>>, vector<2x8x32xf32>,
    } else {
    }
    return
  }
  func.func @transform_0(%arg0: i32, %arg1: i32) -> (i32, i32, i32) {
    %c0_i32 = arith.constant 0 : i32
    %c0_i32_0 = arith.constant 0 : i32
    %c0_i32_1 = arith.constant 0 : i32
    return %arg0, %c0_i32, %c0_i32_0 : i32, i32, i32
  }
  func.func @transform_1(%arg0: i32, %arg1: i32) -> (i32, i32) {
    %c0_i32 = arith.constant 0 : i32
    %c0_i32_0 = arith.constant 0 : i32
    %c0_i32_1 = arith.constant 0 : i32
    return %c0_i32, %c0_i32_0 : i32, i32
  }
  func.func @transform_2(%arg0: i32, %arg1: i32) -> (i32, i32, i32) {
    %c0_i32 = arith.constant 0 : i32
    %c0_i32_0 = arith.constant 0 : i32
    %c0_i32_1 = arith.constant 0 : i32
    return %arg1, %c0_i32, %c0_i32_0 : i32, i32, i32
  }
  func.func @transform_3(%arg0: i32, %arg1: i32) -> (i32, i32, i32) {
    %c0_i32 = arith.constant 0 : i32
    %c0_i32_0 = arith.constant 0 : i32
    %c0_i32_1 = arith.constant 0 : i32
    return %arg1, %c0_i32, %c0_i32_0 : i32, i32, i32
  }
  func.func @transform_4(%arg0: i32, %arg1: i32) -> (i32, i32, i32) {
    %c0_i32 = arith.constant 0 : i32
    %c0_i32_0 = arith.constant 0 : i32
    %c0_i32_1 = arith.constant 0 : i32
    return %arg1, %c0_i32, %c0_i32_0 : i32, i32, i32
  }
  func.func @transform_5(%arg0: i32, %arg1: i32) -> (i32, i32, i32) {
    %c0_i32 = arith.constant 0 : i32
    %c0_i32_0 = arith.constant 0 : i32
    %c0_i32_1 = arith.constant 0 : i32
    return %arg1, %c0_i32, %c0_i32_0 : i32, i32, i32
  }
  func.func @transform_6(%arg0: i32, %arg1: i32) -> (i32, i32, i32) {
    %c0_i32 = arith.constant 0 : i32
    %c0_i32_0 = arith.constant 0 : i32
    %c0_i32_1 = arith.constant 0 : i32
    return %arg1, %c0_i32, %c0_i32_0 : i32, i32, i32
  }
  func.func @transform_7(%arg0: i32, %arg1: i32) -> (i32, i32, i32) {
    %c0_i32 = arith.constant 0 : i32
    %c0_i32_0 = arith.constant 0 : i32
    %c0_i32_1 = arith.constant 0 : i32
    return %arg1, %c0_i32, %c0_i32_0 : i32, i32, i32
  }
  func.func @transform_8(%arg0: i32, %arg1: i32) -> (i32, i32, i32) {
    %c0_i32 = arith.constant 0 : i32
    %c0_i32_0 = arith.constant 0 : i32
    %c0_i32_1 = arith.constant 0 : i32
    return %arg1, %c0_i32, %c0_i32_0 : i32, i32, i32
  }
  func.func @transform_9(%arg0: i32, %arg1: i32) -> (i32, i32, i32) {
    %c0_i32 = arith.constant 0 : i32
    %c0_i32_0 = arith.constant 0 : i32
    %c0_i32_1 = arith.constant 0 : i32
    return %arg1, %c0_i32, %c0_i32_0 : i32, i32, i32
  }
  func.func @transform_10(%arg0: i32, %arg1: i32) -> (i32, i32, i32) {
    %c0_i32 = arith.constant 0 : i32
    %c0_i32_0 = arith.constant 0 : i32
    %c0_i32_1 = arith.constant 0 : i32
    return %arg1, %c0_i32, %c0_i32_0 : i32, i32, i32
  }
  func.func @transform_11(%arg0: i32, %arg1: i32) -> (i32, i32, i32) {
    %c0_i32 = arith.constant 0 : i32
    %c0_i32_0 = arith.constant 0 : i32
    %c0_i32_1 = arith.constant 0 : i32
    return %arg1, %c0_i32, %c0_i32_0 : i32, i32, i32
  }
  func.func @transform_12(%arg0: i32, %arg1: i32) -> (i32, i32, i32) {
    %c0_i32 = arith.constant 0 : i32
    %c0_i32_0 = arith.constant 0 : i32
    %c0_i32_1 = arith.constant 0 : i32
    return %arg1, %c0_i32, %c0_i32_0 : i32, i32, i32
  }
  func.func @transform_13(%arg0: i32, %arg1: i32) -> (i32, i32, i32) {
    %c0_i32 = arith.constant 0 : i32
    %c0_i32_0 = arith.constant 0 : i32
    %c0_i32_1 = arith.constant 0 : i32
    return %arg1, %c0_i32, %c0_i32_0 : i32, i32, i32
  }
  func.func @transform_14(%arg0: i32, %arg1: i32) -> (i32, i32, i32) {
    %c0_i32 = arith.constant 0 : i32
    %c0_i32_0 = arith.constant 0 : i32
    %c0_i32_1 = arith.constant 0 : i32
    return %arg0, %c0_i32, %c0_i32_0 : i32, i32, i32
  }
}

</mosaic_0001>

<llo_original>
// kernel: tpu_custom_call.1
$region0: #{tpu_custom_call.1}
  #allocation0 [shape = 'u32[]', space=smem, size = 0x4, offset = 0x4, fixed_abs, tag = 'smem constant byte address 0x4 - core index']
  #allocation1 [shape = 'u32[72,128]{1,0:T(1,128)}', space=vmem, size = 0x9000, scoped, tag = 'internal scratch']
  #allocation2 [shape = 'f32[2,8,32]{2,1,0:T(8,128)}', space=vmem, size = 0x2000, scoped, tag = 'scratch operand']
  #allocation3 [shape = 'f32[2,8,32]{2,1,0:T(8,128)}', space=vmem, size = 0x2000, scoped, tag = 'scratch operand']
  %s0 = inlined_call_operand.vmem [shape: f32[4,8,32], index: 0, kind: input, shape index: {}]
  %s1 = inlined_call_operand.vmem [shape: f32[8,32], index: 1, kind: input, shape index: {}]
  %s2 = inlined_call_operand.vmem [shape: f32[2,1,32], index: 2, kind: input, shape index: {}]
  %s3 = inlined_call_operand.vmem [shape: f32[2,1,32], index: 3, kind: input, shape index: {}]
  %s4 = inlined_call_operand.vmem [shape: bf16[2,32,96], index: 4, kind: input, shape index: {}]
  %s5 = inlined_call_operand.vmem [shape: f32[2,1,96], index: 5, kind: input, shape index: {}]
  %s6 = inlined_call_operand.vmem [shape: bf16[2,32,32], index: 6, kind: input, shape index: {}]
  %s7 = inlined_call_operand.vmem [shape: f32[2,1,32], index: 7, kind: input, shape index: {}]
  %s8 = inlined_call_operand.vmem [shape: f32[2,1,32], index: 8, kind: input, shape index: {}]
  %s9 = inlined_call_operand.vmem [shape: f32[2,1,32], index: 9, kind: input, shape index: {}]
  %s10 = inlined_call_operand.vmem [shape: bf16[2,32,128], index: 10, kind: input, shape index: {}]
  %s11 = inlined_call_operand.vmem [shape: f32[2,1,128], index: 11, kind: input, shape index: {}]
  %s12 = inlined_call_operand.vmem [shape: bf16[2,128,32], index: 12, kind: input, shape index: {}]
  %s13 = inlined_call_operand.vmem [shape: f32[2,1,32], index: 13, kind: input, shape index: {}]
  %s14 = inlined_call_operand.hbm [shape: f32[4,8,32], index: 14, kind: output, shape index: {}]
  %s15 = sld [smem:[#allocation0]]
  $region97: #{tpu_custom_call.1} parent=0
    _
  %s17 = ssub.s32 1, %s15
  %s18 = scalar_select 0, %s17, %s15
  $region1: #{tpu_custom_call.1} parent=0
    #allocation4 [shape = 'u8[16384]{0}', space=vmem, size = 0x4000, scoped, tag = 'output window, operand 0']
    #allocation5 [shape = 's32[2]{0}', space=sflag, size = 0x8, scoped, tag = 'scoped memory for tpu_custom_call.1']
    %19 = vsyncpa [#allocation5], 0
    %s20 = scalar_lea.sflag [#allocation5], 1
    %21 = vsyncpa %s20, 0
    loop: start=0, step=1, limit=6
    $region2: #{tpu_custom_call.1} parent=1 // loop_pre_header
      _
    $region3: #{tpu_custom_call.1} parent=1 // loop_header
      %s23 = sphi 0, %s27
      %p24 = scmp.ge.s32.totalorder %s23, 6
      %s30 = sphi 0, %s42
      %s31 = sphi 0, %s38
      %s32 = sphi 0, %s30
      %s33 = sphi 0, %s31
      %s34 = sphi 0, %s32
      %s35 = sphi 0, %s33
      %s45 = sphi 0, %s47
      %s48 = sphi 0, %s45
      %s49 = sphi 0, %s48
      %s65 = sphi 0, %s49
      %s69 = sphi 0, %s69
      %s71 = sphi 0, %s69
      %s72 = sphi 0, %s71
      %s86 = sphi 0, %s72
      %s92 = sphi 0, %s94
      %s95 = sphi 0, %s92
      %s96 = sphi 0, %s95
      %s112 = sphi 0, %s96
      %s118 = sphi 0, %s120
      %s121 = sphi 0, %s118
      %s122 = sphi 0, %s121
      %s138 = sphi 0, %s122
      %s144 = sphi 0, %s146
      %s147 = sphi 0, %s144
      %s148 = sphi 0, %s147
      %s164 = sphi 0, %s148
      %s170 = sphi 0, %s172
      %s173 = sphi 0, %s170
      %s174 = sphi 0, %s173
      %s190 = sphi 0, %s174
      %s196 = sphi 0, %s198
      %s199 = sphi 0, %s196
      %s200 = sphi 0, %s199
      %s216 = sphi 0, %s200
      %s222 = sphi 0, %s224
      %s225 = sphi 0, %s222
      %s226 = sphi 0, %s225
      %s242 = sphi 0, %s226
      %s248 = sphi 0, %s250
      %s251 = sphi 0, %s248
      %s252 = sphi 0, %s251
      %s268 = sphi 0, %s252
      %s274 = sphi 0, %s276
      %s277 = sphi 0, %s274
      %s278 = sphi 0, %s277
      %s294 = sphi 0, %s278
      %s300 = sphi 0, %s302
      %s303 = sphi 0, %s300
      %s304 = sphi 0, %s303
      %s320 = sphi 0, %s304
      %s326 = sphi 0, %s328
      %s329 = sphi 0, %s326
      %s330 = sphi 0, %s329
      %s346 = sphi 0, %s330
      %s352 = sphi 0, %s354
      %s355 = sphi 0, %s352
      %s356 = sphi 0, %s355
      %s372 = sphi 0, %s356
      %s378 = sphi 0, %s380
      %s381 = sphi 0, %s378
      %s382 = sphi 0, %s381
      %s398 = sphi 0, %s382
      %s404 = sphi 0, %s406
      %s407 = sphi 0, %s404
      %s408 = sphi 0, %s407
      %s424 = sphi 0, %s408
    $region4: #{tpu_custom_call.1} parent=1 // loop_header_branch
      %26 = sbr.rel (%p24) target = $region8
    $region5: #{tpu_custom_call.1} parent=1 // loop_body
      %s28 = ssub.s32 %s23, 1
      %s29 = ssub.s32 %s23, 2
      %s36 = sadd.s32 1, %s31
      %p37 = scmp.ge.s32.totalorder %s36, 2
      %s38 = scalar_select %p37, 0, %s36
      %s39 = sadd.s32 1, %s30
      %s40 = scalar_select %p37, %s39, %s30
      %p41 = scmp.ge.s32.totalorder %s40, 2
      %s42 = scalar_select %p41, 0, %s40
      %s43 = ssub.s32 %s30, %s42
      %p44 = scmp.eq.s32.totalorder %s43, 0
      %s46 = sadd.s32 %s45, 1
      %s47 = scalar_select %p44, %s45, %s46
      %p50 = pneg %p44
      %p51 = scmp.eq.s32.totalorder %s23, 3
      %p52 = por %p50, %p51
      %p53 = scmp.ne.s32.totalorder %s45, %s48
      %p54 = scmp.eq.s32.totalorder %s23, 0
      %p55 = por %p53, %p54
      %p56 = scmp.ne.s32.totalorder %s45, %s48
      %p57 = scmp.eq.s32.totalorder %s28, 3
      %p58 = por %p56, %p57
      %p59 = scmp.ne.s32.totalorder %s48, %s49
      %p60 = scmp.eq.s32.totalorder %s28, 0
      %p61 = por %p59, %p60
      %p62 = scmp.ne.s32.totalorder %s48, %s49
      %p63 = scmp.eq.s32.totalorder %s29, 3
      %p64 = por %p62, %p63
      %p66 = scmp.ne.s32.totalorder %s49, %s65
      %p67 = scmp.eq.s32.totalorder %s29, 0
      %p68 = por %p66, %p67
      %s70 = sadd.s32 %s69, 1
      %p73 = scmp.eq.s32.totalorder %s23, 3
      %p74 = scmp.ne.s32.totalorder %s69, %s71
      %p75 = scmp.eq.s32.totalorder %s23, 0
      %p76 = por %p74, %p75
      %p77 = scmp.ne.s32.totalorder %s69, %s71
      %p78 = scmp.eq.s32.totalorder %s28, 3
      %p79 = por %p77, %p78
      %p80 = scmp.ne.s32.totalorder %s71, %s72
      %p81 = scmp.eq.s32.totalorder %s28, 0
      %p82 = por %p80, %p81
      %p83 = scmp.ne.s32.totalorder %s71, %s72
      %p84 = scmp.eq.s32.totalorder %s29, 3
      %p85 = por %p83, %p84
      %p87 = scmp.ne.s32.totalorder %s72, %s86
      %p88 = scmp.eq.s32.totalorder %s29, 0
      %p89 = por %p87, %p88
      %s90 = ssub.s32 %s31, %s38
      %p91 = scmp.eq.s32.totalorder %s90, 0
      %s93 = sadd.s32 %s92, 1
      %s94 = scalar_select %p91, %s92, %s93
      %p97 = pneg %p91
      %p98 = scmp.eq.s32.totalorder %s23, 3
      %p99 = por %p97, %p98
      %p100 = scmp.ne.s32.totalorder %s92, %s95
      %p101 = scmp.eq.s32.totalorder %s23, 0
      %p102 = por %p100, %p101
      %p103 = scmp.ne.s32.totalorder %s92, %s95
      %p104 = scmp.eq.s32.totalorder %s28, 3
      %p105 = por %p103, %p104
      %p106 = scmp.ne.s32.totalorder %s95, %s96
      %p107 = scmp.eq.s32.totalorder %s28, 0
      %p108 = por %p106, %p107
      %p109 = scmp.ne.s32.totalorder %s95, %s96
      %p110 = scmp.eq.s32.totalorder %s29, 3
      %p111 = por %p109, %p110
      %p113 = scmp.ne.s32.totalorder %s96, %s112
      %p114 = scmp.eq.s32.totalorder %s29, 0
      %p115 = por %p113, %p114
      %s116 = ssub.s32 %s31, %s38
      %p117 = scmp.eq.s32.totalorder %s116, 0
      %s119 = sadd.s32 %s118, 1
      %s120 = scalar_select %p117, %s118, %s119
      %p123 = pneg %p117
      %p124 = scmp.eq.s32.totalorder %s23, 3
      %p125 = por %p123, %p124
      %p126 = scmp.ne.s32.totalorder %s118, %s121
      %p127 = scmp.eq.s32.totalorder %s23, 0
      %p128 = por %p126, %p127
      %p129 = scmp.ne.s32.totalorder %s118, %s121
      %p130 = scmp.eq.s32.totalorder %s28, 3
      %p131 = por %p129, %p130
      %p132 = scmp.ne.s32.totalorder %s121, %s122
      %p133 = scmp.eq.s32.totalorder %s28, 0
      %p134 = por %p132, %p133
      %p135 = scmp.ne.s32.totalorder %s121, %s122
      %p136 = scmp.eq.s32.totalorder %s29, 3
      %p137 = por %p135, %p136
      %p139 = scmp.ne.s32.totalorder %s122, %s138
      %p140 = scmp.eq.s32.totalorder %s29, 0
      %p141 = por %p139, %p140
      %s142 = ssub.s32 %s31, %s38
      %p143 = scmp.eq.s32.totalorder %s142, 0
      %s145 = sadd.s32 %s144, 1
      %s146 = scalar_select %p143, %s144, %s145
      %p149 = pneg %p143
      %p150 = scmp.eq.s32.totalorder %s23, 3
      %p151 = por %p149, %p150
      %p152 = scmp.ne.s32.totalorder %s144, %s147
      %p153 = scmp.eq.s32.totalorder %s23, 0
      %p154 = por %p152, %p153
      %p155 = scmp.ne.s32.totalorder %s144, %s147
      %p156 = scmp.eq.s32.totalorder %s28, 3
      %p157 = por %p155, %p156
      %p158 = scmp.ne.s32.totalorder %s147, %s148
      %p159 = scmp.eq.s32.totalorder %s28, 0
      %p160 = por %p158, %p159
      %p161 = scmp.ne.s32.totalorder %s147, %s148
      %p162 = scmp.eq.s32.totalorder %s29, 3
      %p163 = por %p161, %p162
      %p165 = scmp.ne.s32.totalorder %s148, %s164
      %p166 = scmp.eq.s32.totalorder %s29, 0
      %p167 = por %p165, %p166
      %s168 = ssub.s32 %s31, %s38
      %p169 = scmp.eq.s32.totalorder %s168, 0
      %s171 = sadd.s32 %s170, 1
      %s172 = scalar_select %p169, %s170, %s171
      %p175 = pneg %p169
      %p176 = scmp.eq.s32.totalorder %s23, 3
      %p177 = por %p175, %p176
      %p178 = scmp.ne.s32.totalorder %s170, %s173
      %p179 = scmp.eq.s32.totalorder %s23, 0
      %p180 = por %p178, %p179
      %p181 = scmp.ne.s32.totalorder %s170, %s173
      %p182 = scmp.eq.s32.totalorder %s28, 3
      %p183 = por %p181, %p182
      %p184 = scmp.ne.s32.totalorder %s173, %s174
      %p185 = scmp.eq.s32.totalorder %s28, 0
      %p186 = por %p184, %p185
      %p187 = scmp.ne.s32.totalorder %s173, %s174
      %p188 = scmp.eq.s32.totalorder %s29, 3
      %p189 = por %p187, %p188
      %p191 = scmp.ne.s32.totalorder %s174, %s190
      %p192 = scmp.eq.s32.totalorder %s29, 0
      %p193 = por %p191, %p192
      %s194 = ssub.s32 %s31, %s38
      %p195 = scmp.eq.s32.totalorder %s194, 0
      %s197 = sadd.s32 %s196, 1
      %s198 = scalar_select %p195, %s196, %s197
      %p201 = pneg %p195
      %p202 = scmp.eq.s32.totalorder %s23, 3
      %p203 = por %p201, %p202
      %p204 = scmp.ne.s32.totalorder %s196, %s199
      %p205 = scmp.eq.s32.totalorder %s23, 0
      %p206 = por %p204, %p205
      %p207 = scmp.ne.s32.totalorder %s196, %s199
      %p208 = scmp.eq.s32.totalorder %s28, 3
      %p209 = por %p207, %p208
      %p210 = scmp.ne.s32.totalorder %s199, %s200
      %p211 = scmp.eq.s32.totalorder %s28, 0
      %p212 = por %p210, %p211
      %p213 = scmp.ne.s32.totalorder %s199, %s200
      %p214 = scmp.eq.s32.totalorder %s29, 3
      %p215 = por %p213, %p214
      %p217 = scmp.ne.s32.totalorder %s200, %s216
      %p218 = scmp.eq.s32.totalorder %s29, 0
      %p219 = por %p217, %p218
      %s220 = ssub.s32 %s31, %s38
      %p221 = scmp.eq.s32.totalorder %s220, 0
      %s223 = sadd.s32 %s222, 1
      %s224 = scalar_select %p221, %s222, %s223
      %p227 = pneg %p221
      %p228 = scmp.eq.s32.totalorder %s23, 3
      %p229 = por %p227, %p228
      %p230 = scmp.ne.s32.totalorder %s222, %s225
      %p231 = scmp.eq.s32.totalorder %s23, 0
      %p232 = por %p230, %p231
      %p233 = scmp.ne.s32.totalorder %s222, %s225
      %p234 = scmp.eq.s32.totalorder %s28, 3
      %p235 = por %p233, %p234
      %p236 = scmp.ne.s32.totalorder %s225, %s226
      %p237 = scmp.eq.s32.totalorder %s28, 0
      %p238 = por %p236, %p237
      %p239 = scmp.ne.s32.totalorder %s225, %s226
      %p240 = scmp.eq.s32.totalorder %s29, 3
      %p241 = por %p239, %p240
      %p243 = scmp.ne.s32.totalorder %s226, %s242
      %p244 = scmp.eq.s32.totalorder %s29, 0
      %p245 = por %p243, %p244
      %s246 = ssub.s32 %s31, %s38
      %p247 = scmp.eq.s32.totalorder %s246, 0
      %s249 = sadd.s32 %s248, 1
      %s250 = scalar_select %p247, %s248, %s249
      %p253 = pneg %p247
      %p254 = scmp.eq.s32.totalorder %s23, 3
      %p255 = por %p253, %p254
      %p256 = scmp.ne.s32.totalorder %s248, %s251
      %p257 = scmp.eq.s32.totalorder %s23, 0
      %p258 = por %p256, %p257
      %p259 = scmp.ne.s32.totalorder %s248, %s251
      %p260 = scmp.eq.s32.totalorder %s28, 3
      %p261 = por %p259, %p260
      %p262 = scmp.ne.s32.totalorder %s251, %s252
      %p263 = scmp.eq.s32.totalorder %s28, 0
      %p264 = por %p262, %p263
      %p265 = scmp.ne.s32.totalorder %s251, %s252
      %p266 = scmp.eq.s32.totalorder %s29, 3
      %p267 = por %p265, %p266
      %p269 = scmp.ne.s32.totalorder %s252, %s268
      %p270 = scmp.eq.s32.totalorder %s29, 0
      %p271 = por %p269, %p270
      %s272 = ssub.s32 %s31, %s38
      %p273 = scmp.eq.s32.totalorder %s272, 0
      %s275 = sadd.s32 %s274, 1
      %s276 = scalar_select %p273, %s274, %s275
      %p279 = pneg %p273
      %p280 = scmp.eq.s32.totalorder %s23, 3
      %p281 = por %p279, %p280
      %p282 = scmp.ne.s32.totalorder %s274, %s277
      %p283 = scmp.eq.s32.totalorder %s23, 0
      %p284 = por %p282, %p283
      %p285 = scmp.ne.s32.totalorder %s274, %s277
      %p286 = scmp.eq.s32.totalorder %s28, 3
      %p287 = por %p285, %p286
      %p288 = scmp.ne.s32.totalorder %s277, %s278
      %p289 = scmp.eq.s32.totalorder %s28, 0
      %p290 = por %p288, %p289
      %p291 = scmp.ne.s32.totalorder %s277, %s278
      %p292 = scmp.eq.s32.totalorder %s29, 3
      %p293 = por %p291, %p292
      %p295 = scmp.ne.s32.totalorder %s278, %s294
      %p296 = scmp.eq.s32.totalorder %s29, 0
      %p297 = por %p295, %p296
      %s298 = ssub.s32 %s31, %s38
      %p299 = scmp.eq.s32.totalorder %s298, 0
      %s301 = sadd.s32 %s300, 1
      %s302 = scalar_select %p299, %s300, %s301
      %p305 = pneg %p299
      %p306 = scmp.eq.s32.totalorder %s23, 3
      %p307 = por %p305, %p306
      %p308 = scmp.ne.s32.totalorder %s300, %s303
      %p309 = scmp.eq.s32.totalorder %s23, 0
      %p310 = por %p308, %p309
      %p311 = scmp.ne.s32.totalorder %s300, %s303
      %p312 = scmp.eq.s32.totalorder %s28, 3
      %p313 = por %p311, %p312
      %p314 = scmp.ne.s32.totalorder %s303, %s304
      %p315 = scmp.eq.s32.totalorder %s28, 0
      %p316 = por %p314, %p315
      %p317 = scmp.ne.s32.totalorder %s303, %s304
      %p318 = scmp.eq.s32.totalorder %s29, 3
      %p319 = por %p317, %p318
      %p321 = scmp.ne.s32.totalorder %s304, %s320
      %p322 = scmp.eq.s32.totalorder %s29, 0
      %p323 = por %p321, %p322
      %s324 = ssub.s32 %s31, %s38
      %p325 = scmp.eq.s32.totalorder %s324, 0
      %s327 = sadd.s32 %s326, 1
      %s328 = scalar_select %p325, %s326, %s327
      %p331 = pneg %p325
      %p332 = scmp.eq.s32.totalorder %s23, 3
      %p333 = por %p331, %p332
      %p334 = scmp.ne.s32.totalorder %s326, %s329
      %p335 = scmp.eq.s32.totalorder %s23, 0
      %p336 = por %p334, %p335
      %p337 = scmp.ne.s32.totalorder %s326, %s329
      %p338 = scmp.eq.s32.totalorder %s28, 3
      %p339 = por %p337, %p338
      %p340 = scmp.ne.s32.totalorder %s329, %s330
      %p341 = scmp.eq.s32.totalorder %s28, 0
      %p342 = por %p340, %p341
      %p343 = scmp.ne.s32.totalorder %s329, %s330
      %p344 = scmp.eq.s32.totalorder %s29, 3
      %p345 = por %p343, %p344
      %p347 = scmp.ne.s32.totalorder %s330, %s346
      %p348 = scmp.eq.s32.totalorder %s29, 0
      %p349 = por %p347, %p348
      %s350 = ssub.s32 %s31, %s38
      %p351 = scmp.eq.s32.totalorder %s350, 0
      %s353 = sadd.s32 %s352, 1
      %s354 = scalar_select %p351, %s352, %s353
      %p357 = pneg %p351
      %p358 = scmp.eq.s32.totalorder %s23, 3
      %p359 = por %p357, %p358
      %p360 = scmp.ne.s32.totalorder %s352, %s355
      %p361 = scmp.eq.s32.totalorder %s23, 0
      %p362 = por %p360, %p361
      %p363 = scmp.ne.s32.totalorder %s352, %s355
      %p364 = scmp.eq.s32.totalorder %s28, 3
      %p365 = por %p363, %p364
      %p366 = scmp.ne.s32.totalorder %s355, %s356
      %p367 = scmp.eq.s32.totalorder %s28, 0
      %p368 = por %p366, %p367
      %p369 = scmp.ne.s32.totalorder %s355, %s356
      %p370 = scmp.eq.s32.totalorder %s29, 3
      %p371 = por %p369, %p370
      %p373 = scmp.ne.s32.totalorder %s356, %s372
      %p374 = scmp.eq.s32.totalorder %s29, 0
      %p375 = por %p373, %p374
      %s376 = ssub.s32 %s31, %s38
      %p377 = scmp.eq.s32.totalorder %s376, 0
      %s379 = sadd.s32 %s378, 1
      %s380 = scalar_select %p377, %s378, %s379
      %p383 = pneg %p377
      %p384 = scmp.eq.s32.totalorder %s23, 3
      %p385 = por %p383, %p384
      %p386 = scmp.ne.s32.totalorder %s378, %s381
      %p387 = scmp.eq.s32.totalorder %s23, 0
      %p388 = por %p386, %p387
      %p389 = scmp.ne.s32.totalorder %s378, %s381
      %p390 = scmp.eq.s32.totalorder %s28, 3
      %p391 = por %p389, %p390
      %p392 = scmp.ne.s32.totalorder %s381, %s382
      %p393 = scmp.eq.s32.totalorder %s28, 0
      %p394 = por %p392, %p393
      %p395 = scmp.ne.s32.totalorder %s381, %s382
      %p396 = scmp.eq.s32.totalorder %s29, 3
      %p397 = por %p395, %p396
      %p399 = scmp.ne.s32.totalorder %s382, %s398
      %p400 = scmp.eq.s32.totalorder %s29, 0
      %p401 = por %p399, %p400
      %s402 = ssub.s32 %s30, %s42
      %p403 = scmp.eq.s32.totalorder %s402, 0
      %s405 = sadd.s32 %s404, 1
      %s406 = scalar_select %p403, %s404, %s405
      %p409 = pneg %p403
      %p410 = scmp.eq.s32.totalorder %s23, 3
      %p411 = por %p409, %p410
      %p412 = scmp.ne.s32.totalorder %s404, %s407
      %p413 = scmp.eq.s32.totalorder %s23, 0
      %p414 = por %p412, %p413
      %p415 = scmp.ne.s32.totalorder %s404, %s407
      %p416 = scmp.eq.s32.totalorder %s28, 3
      %p417 = por %p415, %p416
      %p418 = scmp.ne.s32.totalorder %s407, %s408
      %p419 = scmp.eq.s32.totalorder %s28, 0
      %p420 = por %p418, %p419
      %p421 = scmp.ne.s32.totalorder %s407, %s408
      %p422 = scmp.eq.s32.totalorder %s29, 3
      %p423 = por %p421, %p422
      %p425 = scmp.ne.s32.totalorder %s408, %s424
      %p426 = scmp.eq.s32.totalorder %s29, 0
      %p427 = por %p425, %p426
      %p428 = scmp.le.s32.totalorder 1, %s23
      %p429 = scmp.lt.s32.totalorder %s23, 5
      %p430 = pnand %p428, %p429
      %p431 = pneg %p430
      // Predicated region
      $region9: #{tpu_custom_call.1} parent=5 // pred_check
        _
      $region10: #{tpu_custom_call.1} parent=5 // pred_check_branch
        %433 = sbr.rel (%p430) target = $region12
      $region11: #{tpu_custom_call.1} parent=5 // pred_region
        %s434 = ssub.s32 %s23, 1
        // Predicated region
        $region13: #{tpu_custom_call.1} parent=11 // pred_check
          %p435 = pneg %p82
        $region14: #{tpu_custom_call.1} parent=11 // pred_check_branch
          %437 = sbr.rel (%p435) target = $region16
        $region15: #{tpu_custom_call.1} parent=11 // pred_region
          _
        $region16: #{tpu_custom_call.1} parent=11 // pred_fallthru
          _
      $region12: #{tpu_custom_call.1} parent=5 // pred_fallthru
        _
      %p438 = scmp.lt.s32.totalorder %s23, 4
      // Predicated region
      $region17: #{tpu_custom_call.1} parent=5 // pred_check
        %p439 = pneg %p438
      $region18: #{tpu_custom_call.1} parent=5 // pred_check_branch
        %441 = sbr.rel (%p439) target = $region20
      $region19: #{tpu_custom_call.1} parent=5 // pred_region
        // Predicated region
        $region21: #{tpu_custom_call.1} parent=19 // pred_check
          %p442 = pneg %p55
        $region22: #{tpu_custom_call.1} parent=19 // pred_check_branch
          %444 = sbr.rel (%p442) target = $region24
        $region23: #{tpu_custom_call.1} parent=19 // pred_region
          %s445 = smul.u32 2, %s30
          %p446 = scmp.lt.s32.totalorder %s445, 3
          %s447 = scalar_select %p446, %s445, 3
          %s448 = smul.addr %s447, 8
          %s449 = scalar_lea.vmem %s0, %s448
          %s450 = smul.u32 2, %s30
        $region24: #{tpu_custom_call.1} parent=19 // pred_fallthru
          _
        // Predicated region
        $region25: #{tpu_custom_call.1} parent=19 // pred_check
          %p451 = pneg %p102
        $region26: #{tpu_custom_call.1} parent=19 // pred_check_branch
          %453 = sbr.rel (%p451) target = $region28
        $region27: #{tpu_custom_call.1} parent=19 // pred_region
          %p454 = scmp.lt.s32.totalorder %s31, 1
          %s455 = scalar_select %p454, %s31, 1
          %s456 = scalar_lea.vmem %s2, %s455
        $region28: #{tpu_custom_call.1} parent=19 // pred_fallthru
          _
        // Predicated region
        $region29: #{tpu_custom_call.1} parent=19 // pred_check
          %p457 = pneg %p128
        $region30: #{tpu_custom_call.1} parent=19 // pred_check_branch
          %459 = sbr.rel (%p457) target = $region32
        $region31: #{tpu_custom_call.1} parent=19 // pred_region
          %p460 = scmp.lt.s32.totalorder %s31, 1
          %s461 = scalar_select %p460, %s31, 1
          %s462 = scalar_lea.vmem %s3, %s461
        $region32: #{tpu_custom_call.1} parent=19 // pred_fallthru
          _
        // Predicated region
        $region33: #{tpu_custom_call.1} parent=19 // pred_check
          %p463 = pneg %p154
        $region34: #{tpu_custom_call.1} parent=19 // pred_check_branch
          %465 = sbr.rel (%p463) target = $region36
        $region35: #{tpu_custom_call.1} parent=19 // pred_region
          %p466 = scmp.lt.s32.totalorder %s31, 1
          %s467 = scalar_select %p466, %s31, 1
          %s468 = smul.addr %s467, 4
          %s469 = smul.addr %s468, 4
          %s470 = scalar_lea.vmem %s4, %s469
        $region36: #{tpu_custom_call.1} parent=19 // pred_fallthru
          _
        // Predicated region
        $region37: #{tpu_custom_call.1} parent=19 // pred_check
          %p471 = pneg %p180
        $region38: #{tpu_custom_call.1} parent=19 // pred_check_branch
          %473 = sbr.rel (%p471) target = $region40
        $region39: #{tpu_custom_call.1} parent=19 // pred_region
          %p474 = scmp.lt.s32.totalorder %s31, 1
          %s475 = scalar_select %p474, %s31, 1
          %s476 = scalar_lea.vmem %s5, %s475
        $region40: #{tpu_custom_call.1} parent=19 // pred_fallthru
          _
        // Predicated region
        $region41: #{tpu_custom_call.1} parent=19 // pred_check
          %p477 = pneg %p206
        $region42: #{tpu_custom_call.1} parent=19 // pred_check_branch
          %479 = sbr.rel (%p477) target = $region44
        $region43: #{tpu_custom_call.1} parent=19 // pred_region
          %p480 = scmp.lt.s32.totalorder %s31, 1
          %s481 = scalar_select %p480, %s31, 1
          %s482 = smul.addr %s481, 4
          %s483 = smul.addr %s482, 4
          %s484 = scalar_lea.vmem %s6, %s483
        $region44: #{tpu_custom_call.1} parent=19 // pred_fallthru
          _
        // Predicated region
        $region45: #{tpu_custom_call.1} parent=19 // pred_check
          %p485 = pneg %p232
        $region46: #{tpu_custom_call.1} parent=19 // pred_check_branch
          %487 = sbr.rel (%p485) target = $region48
        $region47: #{tpu_custom_call.1} parent=19 // pred_region
          %p488 = scmp.lt.s32.totalorder %s31, 1
          %s489 = scalar_select %p488, %s31, 1
          %s490 = scalar_lea.vmem %s7, %s489
        $region48: #{tpu_custom_call.1} parent=19 // pred_fallthru
          _
        // Predicated region
        $region49: #{tpu_custom_call.1} parent=19 // pred_check
          %p491 = pneg %p258
        $region50: #{tpu_custom_call.1} parent=19 // pred_check_branch
          %493 = sbr.rel (%p491) target = $region52
        $region51: #{tpu_custom_call.1} parent=19 // pred_region
          %p494 = scmp.lt.s32.totalorder %s31, 1
          %s495 = scalar_select %p494, %s31, 1
          %s496 = scalar_lea.vmem %s8, %s495
        $region52: #{tpu_custom_call.1} parent=19 // pred_fallthru
          _
        // Predicated region
        $region53: #{tpu_custom_call.1} parent=19 // pred_check
          %p497 = pneg %p284
        $region54: #{tpu_custom_call.1} parent=19 // pred_check_branch
          %499 = sbr.rel (%p497) target = $region56
        $region55: #{tpu_custom_call.1} parent=19 // pred_region
          %p500 = scmp.lt.s32.totalorder %s31, 1
          %s501 = scalar_select %p500, %s31, 1
          %s502 = scalar_lea.vmem %s9, %s501
        $region56: #{tpu_custom_call.1} parent=19 // pred_fallthru
          _
        // Predicated region
        $region57: #{tpu_custom_call.1} parent=19 // pred_check
          %p503 = pneg %p310
        $region58: #{tpu_custom_call.1} parent=19 // pred_check_branch
          %505 = sbr.rel (%p503) target = $region60
        $region59: #{tpu_custom_call.1} parent=19 // pred_region
          %p506 = scmp.lt.s32.totalorder %s31, 1
          %s507 = scalar_select %p506, %s31, 1
          %s508 = smul.addr %s507, 4
          %s509 = smul.addr %s508, 4
          %s510 = scalar_lea.vmem %s10, %s509
        $region60: #{tpu_custom_call.1} parent=19 // pred_fallthru
          _
        // Predicated region
        $region61: #{tpu_custom_call.1} parent=19 // pred_check
          %p511 = pneg %p336
        $region62: #{tpu_custom_call.1} parent=19 // pred_check_branch
          %513 = sbr.rel (%p511) target = $region64
        $region63: #{tpu_custom_call.1} parent=19 // pred_region
          %p514 = scmp.lt.s32.totalorder %s31, 1
          %s515 = scalar_select %p514, %s31, 1
          %s516 = scalar_lea.vmem %s11, %s515
        $region64: #{tpu_custom_call.1} parent=19 // pred_fallthru
          _
        // Predicated region
        $region65: #{tpu_custom_call.1} parent=19 // pred_check
          %p517 = pneg %p362
        $region66: #{tpu_custom_call.1} parent=19 // pred_check_branch
          %519 = sbr.rel (%p517) target = $region68
        $region67: #{tpu_custom_call.1} parent=19 // pred_region
          %p520 = scmp.lt.s32.totalorder %s31, 1
          %s521 = scalar_select %p520, %s31, 1
          %s522 = smul.addr %s521, 16
          %s523 = smul.addr %s522, 4
          %s524 = scalar_lea.vmem %s12, %s523
        $region68: #{tpu_custom_call.1} parent=19 // pred_fallthru
          _
        // Predicated region
        $region69: #{tpu_custom_call.1} parent=19 // pred_check
          %p525 = pneg %p388
        $region70: #{tpu_custom_call.1} parent=19 // pred_check_branch
          %527 = sbr.rel (%p525) target = $region72
        $region71: #{tpu_custom_call.1} parent=19 // pred_region
          %p528 = scmp.lt.s32.totalorder %s31, 1
          %s529 = scalar_select %p528, %s31, 1
          %s530 = scalar_lea.vmem %s13, %s529
        $region72: #{tpu_custom_call.1} parent=19 // pred_fallthru
          _
      $region20: #{tpu_custom_call.1} parent=5 // pred_fallthru
        _
      %p531 = scmp.le.s32.totalorder 1, %s23
      %p532 = scmp.lt.s32.totalorder %s23, 5
      %p533 = pnand %p531, %p532
      %p534 = pneg %p533
      // Predicated region
      $region73: #{tpu_custom_call.1} parent=5 // pred_check
        _
      $region74: #{tpu_custom_call.1} parent=5 // pred_check_branch
        %536 = sbr.rel (%p533) target = $region76
      $region75: #{tpu_custom_call.1} parent=5 // pred_region
        %s537 = ssub.s32 %s23, 1
        %s538 = smul.u32 2, %s32
        %p539 = scmp.lt.s32.totalorder %s538, 3
        %s540 = scalar_select %p539, %s538, 3
        %s541 = smul.addr %s540, 8
        %s542 = scalar_lea.vmem %s0, %s541
        %p543 = pneg %p61
        %p544 = pneg %p58
        %p545 = pneg %p82
        %p546 = pneg %p79
        %p547 = scmp.lt.s32.totalorder %s33, 1
        %s548 = scalar_select %p547, %s33, 1
        %s549 = scalar_lea.vmem %s2, %s548
        %p550 = pneg %p108
        %p551 = pneg %p105
        %p552 = scmp.lt.s32.totalorder %s33, 1
        %s553 = scalar_select %p552, %s33, 1
        %s554 = scalar_lea.vmem %s3, %s553
        %p555 = pneg %p134
        %p556 = pneg %p131
        %p557 = scmp.lt.s32.totalorder %s33, 1
        %s558 = scalar_select %p557, %s33, 1
        %s559 = smul.addr %s558, 4
        %s560 = smul.addr %s559, 4
        %s561 = scalar_lea.vmem %s4, %s560
        %p562 = pneg %p160
        %p563 = pneg %p157
        %p564 = scmp.lt.s32.totalorder %s33, 1
        %s565 = scalar_select %p564, %s33, 1
        %s566 = scalar_lea.vmem %s5, %s565
        %p567 = pneg %p186
        %p568 = pneg %p183
        %p569 = scmp.lt.s32.totalorder %s33, 1
        %s570 = scalar_select %p569, %s33, 1
        %s571 = smul.addr %s570, 4
        %s572 = smul.addr %s571, 4
        %s573 = scalar_lea.vmem %s6, %s572
        %p574 = pneg %p212
        %p575 = pneg %p209
        %p576 = scmp.lt.s32.totalorder %s33, 1
        %s577 = scalar_select %p576, %s33, 1
        %s578 = scalar_lea.vmem %s7, %s577
        %p579 = pneg %p238
        %p580 = pneg %p235
        %p581 = scmp.lt.s32.totalorder %s33, 1
        %s582 = scalar_select %p581, %s33, 1
        %s583 = scalar_lea.vmem %s8, %s582
        %p584 = pneg %p264
        %p585 = pneg %p261
        %p586 = scmp.lt.s32.totalorder %s33, 1
        %s587 = scalar_select %p586, %s33, 1
        %s588 = scalar_lea.vmem %s9, %s587
        %p589 = pneg %p290
        %p590 = pneg %p287
        %p591 = scmp.lt.s32.totalorder %s33, 1
        %s592 = scalar_select %p591, %s33, 1
        %s593 = smul.addr %s592, 4
        %s594 = smul.addr %s593, 4
        %s595 = scalar_lea.vmem %s10, %s594
        %p596 = pneg %p316
        %p597 = pneg %p313
        %p598 = scmp.lt.s32.totalorder %s33, 1
        %s599 = scalar_select %p598, %s33, 1
        %s600 = scalar_lea.vmem %s11, %s599
        %p601 = pneg %p342
        %p602 = pneg %p339
        %p603 = scmp.lt.s32.totalorder %s33, 1
        %s604 = scalar_select %p603, %s33, 1
        %s605 = smul.addr %s604, 16
        %s606 = smul.addr %s605, 4
        %s607 = scalar_lea.vmem %s12, %s606
        %p608 = pneg %p368
        %p609 = pneg %p365
        %p610 = scmp.lt.s32.totalorder %s33, 1
        %s611 = scalar_select %p610, %s33, 1
        %s612 = scalar_lea.vmem %s13, %s611
        %p613 = pneg %p394
        %p614 = pneg %p391
        %p615 = pneg %p420
        %p616 = pneg %p417
        %s617 = sand.u32 %s407, 1
        %s618 = scalar_lea.sflag [#allocation5], %s617
        %s619 = sand.u32 %s407, 1
        %s620 = smul.addr %s619, 16
        %s621 = scalar_lea.vmem [#allocation4], %s620
        %s622 = smul.u32 2, %s32
        %p623 = scmp.lt.s32.totalorder %s622, 3
        %s624 = scalar_select %p623, %s622, 3
        %s625 = smul.addr %s624, 8
        %s626 = scalar_lea.vmem %s0, %s625
        %s627 = smul.u32 2, %s32
        %p628 = scmp.lt.s32.totalorder %s33, 1
        %s629 = scalar_select %p628, %s33, 1
        %s630 = scalar_lea.vmem %s2, %s629
        %p631 = scmp.lt.s32.totalorder %s33, 1
        %s632 = scalar_select %p631, %s33, 1
        %s633 = scalar_lea.vmem %s3, %s632
        %p634 = scmp.lt.s32.totalorder %s33, 1
        %s635 = scalar_select %p634, %s33, 1
        %s636 = smul.addr %s635, 4
        %s637 = smul.addr %s636, 4
        %s638 = scalar_lea.vmem %s4, %s637
        %p639 = scmp.lt.s32.totalorder %s33, 1
        %s640 = scalar_select %p639, %s33, 1
        %s641 = scalar_lea.vmem %s5, %s640
        %p642 = scmp.lt.s32.totalorder %s33, 1
        %s643 = scalar_select %p642, %s33, 1
        %s644 = smul.addr %s643, 4
        %s645 = smul.addr %s644, 4
        %s646 = scalar_lea.vmem %s6, %s645
        %p647 = scmp.lt.s32.totalorder %s33, 1
        %s648 = scalar_select %p647, %s33, 1
        %s649 = scalar_lea.vmem %s7, %s648
        %p650 = scmp.lt.s32.totalorder %s33, 1
        %s651 = scalar_select %p650, %s33, 1
        %s652 = scalar_lea.vmem %s8, %s651
        %p653 = scmp.lt.s32.totalorder %s33, 1
        %s654 = scalar_select %p653, %s33, 1
        %s655 = scalar_lea.vmem %s9, %s654
        %p656 = scmp.lt.s32.totalorder %s33, 1
        %s657 = scalar_select %p656, %s33, 1
        %s658 = smul.addr %s657, 4
        %s659 = smul.addr %s658, 4
        %s660 = scalar_lea.vmem %s10, %s659
        %p661 = scmp.lt.s32.totalorder %s33, 1
        %s662 = scalar_select %p661, %s33, 1
        %s663 = scalar_lea.vmem %s11, %s662
        %p664 = scmp.lt.s32.totalorder %s33, 1
        %s665 = scalar_select %p664, %s33, 1
        %s666 = smul.addr %s665, 16
        %s667 = smul.addr %s666, 4
        %s668 = scalar_lea.vmem %s12, %s667
        %p669 = scmp.lt.s32.totalorder %s33, 1
        %s670 = scalar_select %p669, %s33, 1
        %s671 = scalar_lea.vmem %s13, %s670
        %s672 = smul.u32 2, %s32
        %p674 = scmp.eq.s32.totalorder %s33, 0
        // Predicated region
        $region77: #{tpu_custom_call.1} parent=75 // pred_check
          %p675 = pneg %p674
        $region78: #{tpu_custom_call.1} parent=75 // pred_check_branch
          %677 = sbr.rel (%p675) target = $region80
        $region79: #{tpu_custom_call.1} parent=75 // pred_region
          %v678 = vld [vmem:[%s626] sm:$0xff]
          %v679 = vld [vmem:[%s626 + $0x8] sm:$0xff]
          %v680 = vld [vmem:[%s1] sm:$0xff]
          %v681 = vadd.f32 %v678, %v680
          %v682 = vadd.f32 %v679, %v680
          %vm683 = vcmask 261120
          %684 = vst.msk [vmem:[#allocation2] sm:$0xff] %vm683, %v681
          %685 = vst.msk [vmem:[#allocation2 + $0x8] sm:$0xff] %vm683, %v682
        $region80: #{tpu_custom_call.1} parent=75 // pred_fallthru
          _
        %v686 = vld [vmem:[#allocation2] sm:$0xff]
        %v687 = vld [vmem:[#allocation2 + $0x8] sm:$0xff]
        %v688 = vld [vmem:[%s630] sm:$0x1]
        %v689 = vld [vmem:[%s633] sm:$0x1]
        %vm690 = vcmask 261120
        %v691 = vsel %vm690, %v686, 0.0
        %692 = vadd.xlane.f32.xlu0 %v691
        %v693 = vpop.xlane.xlu0 %692
        %v694 = vsel %vm690, %v687, 0.0
        %695 = vadd.xlane.f32.xlu0 %v694
        %v696 = vpop.xlane.xlu0 %695
        %v697 = vrcp.pop 32.0
        %v698 = vmul.f32 32.0, %v697
        %v699 = vsub.f32 1.0, %v698
        %v700 = vmul.f32 %v697, %v699
        %v701 = vadd.f32 %v697, %v700
        %vm702 = vweird.f32 %v697
        %v703 = vsel %vm702, %v697, %v701
        %v704 = vmul.f32 %v693, %v703
        %v705 = vmul.f32 %v696, %v703
        %v706 = vsub.f32 %v686, %v704
        %v707 = vsub.f32 %v687, %v705
        %v708 = vmul.f32 %v706, %v706
        %v709 = vmul.f32 %v707, %v707
        %v710 = vsel %vm690, %v708, 0.0
        %711 = vadd.xlane.f32.xlu0 %v710
        %v712 = vpop.xlane.xlu0 %711
        %v713 = vsel %vm690, %v709, 0.0
        %714 = vadd.xlane.f32.xlu0 %v713
        %v715 = vpop.xlane.xlu0 %714
        %v716 = vmul.f32 %v712, %v703
        %v717 = vmul.f32 %v715, %v703
        %v718 = vadd.f32 %v716, 1e-05
        %v719 = vadd.f32 %v717, 1e-05
        %v720 = vrsqrt.pop %v718
        %v721 = vmul.f32 %v720, %v718
        %v722 = vmul.f32 %v721, %v720
        %v723 = vmul.f32 0.5, %v722
        %v724 = vsub.f32 1.5, %v723
        %v725 = vmul.f32 %v720, %v724
        %vm726 = vweird.f32 %v718
        %vm727 = vweird.f32 %v720
        %vm728 = vmor %vm726, %vm727
        %v729 = vsel %vm728, %v720, %v725
        %v730 = vrsqrt.pop %v719
        %v731 = vmul.f32 %v730, %v719
        %v732 = vmul.f32 %v731, %v730
        %v733 = vmul.f32 0.5, %v732
        %v734 = vsub.f32 1.5, %v733
        %v735 = vmul.f32 %v730, %v734
        %vm736 = vweird.f32 %v719
        %vm737 = vweird.f32 %v730
        %vm738 = vmor %vm736, %vm737
        %v739 = vsel %vm738, %v730, %v735
        %v740 = vmul.f32 %v706, %v729
        %v741 = vmul.f32 %v707, %v739
        %v743 = vperm.slane %v688, 0
        %v745 = vmul.f32 %v740, %v743
        %v746 = vmul.f32 %v741, %v743
        %v748 = vperm.slane %v689, 0
        %v750 = vadd.f32 %v745, %v748
        %v751 = vadd.f32 %v746, %v748
        %v752 = vpack.c.bf16 %v751, %v750
        %v753 = vld [vmem:[%s638] sm:$0xf]
        %v754 = vld [vmem:[%s638 + $0x4] sm:$0xf]
        %v755 = vld [vmem:[%s638 + $0x8] sm:$0xf]
        %v756 = vld [vmem:[%s638 + $0xc] sm:$0xf]
        %v757 = vld [vmem:[%s641] sm:$0x1]
        %v759 = vperm.slane %v757, 0
        %v765 = vunpack.c.l.b16 %v753
        %v766 = vunpack.c.l.b16 %v754
        %v767 = vunpack.c.l.b16 %v755
        %v768 = vunpack.c.l.b16 %v756
        %v769 = vpack.c.b16 %v766, %v765
        %v770 = vpack.c.b16 %v768, %v767
        %v774 = vsel %vm690, %v752, 0
        %776 = vmatpush.bf16.msra.mxu0 0
        %777 = vmatpush.bf16.msra.mxu0 0
        %778 = vmatpush.bf16.msra.mxu0 0
        %779 = vmatpush.bf16.msra.mxu0 0
        %780 = vmatpush.bf16.msra.mxu0 0
        %781 = vmatpush.bf16.msra.mxu0 0
        %782 = vmatpush.bf16.msra.mxu0 %v770
        %783 = vmatpush.bf16.msra.mxu0 %v769
        %784 = vmatmul.bf16.gmra.mxu0 %v774
        %v785 = vpop.f32.mrf.mxu0
        %v786 = vadd.f32 %v759, %v785
        %v787 = vpop.f32.mrf.mxu0
        %v788 = vadd.f32 %v759, %v787
        %789 = vdwg.mxu0
        %v790 = vlaneseq
        %v791 = vshrl.u32 %v790, 7
        %v792 = vlaneseq
        %v793 = vand.u32 %v792, 127
        %vm794 = vcmp.gt.s32.totalorder %v793, %v791
        %v795 = vpack.c.bf16 %v786, %v786
        %v796 = vpack.c.bf16 %v788, %v788
        %v798 = vunpack.c.l.b16 %v795
        %v799 = vpack.c.b16 %v798, %v798
        %800 = vrot.lane.b32.xlu0 %v799, 96
        %v801 = vpop.permute.xlu0 %800
        %vm802 = vcmask 64512
        %v804 = vsel %vm802, %v795, 0
        %v807 = vsel %vm802, %v801, 0
        %809 = vmatpush.bf16.xpose.msra.mxu0 0
        %810 = vmatpush.bf16.xpose.msra.mxu0 0
        %811 = vmatpush.bf16.xpose.msra.mxu0 0
        %812 = vmatpush.bf16.xpose.msra.mxu0 0
        %813 = vmatpush.bf16.xpose.msra.mxu0 0
        %814 = vmatpush.bf16.xpose.msra.mxu0 0
        %815 = vmatpush.bf16.xpose.msra.mxu0 0
        %816 = vmatpush.bf16.xpose.msra.mxu0 %v807
        %817 = vmatmul.bf16.gmra.mxu0 %v804
        %v818 = vpop.f32.mrf.mxu0
        %v819 = vadd.f32 0.0, %v818
        %v820 = vpop.f32.mrf.mxu0
        %821 = vdwg.mxu0
        %v823 = vunpack.c.l.b16 %v796
        %v824 = vpack.c.b16 %v823, %v823
        %825 = vrot.lane.b32.xlu0 %v824, 96
        %v826 = vpop.permute.xlu0 %825
        %v828 = vsel %vm802, %v796, 0
        %v831 = vsel %vm802, %v826, 0
        %833 = vmatpush.bf16.xpose.msra.mxu0 0
        %834 = vmatpush.bf16.xpose.msra.mxu0 0
        %835 = vmatpush.bf16.xpose.msra.mxu0 0
        %836 = vmatpush.bf16.xpose.msra.mxu0 0
        %837 = vmatpush.bf16.xpose.msra.mxu0 0
        %838 = vmatpush.bf16.xpose.msra.mxu0 0
        %839 = vmatpush.bf16.xpose.msra.mxu0 0
        %840 = vmatpush.bf16.xpose.msra.mxu0 %v831
        %841 = vmatmul.bf16.gmra.mxu0 %v828
        %v842 = vpop.f32.mrf.mxu0
        %v843 = vadd.f32 0.0, %v842
        %v844 = vpop.f32.mrf.mxu0
        %845 = vdwg.mxu0
        %v846 = vmul.f32 %v819, 0.35355338
        %v847 = vmul.f32 %v843, 0.35355338
        %v848 = vsel %vm794, -3.4028235e+38, %v846
        %v849 = vsel %vm794, -3.4028235e+38, %v847
        %v850 = vsel %vm802, %v848, -inf
        %851 = vmax.xlane.f32.xlu0 %v850
        %v852 = vpop.xlane.xlu0 %851
        %v853 = vsel %vm802, %v849, -inf
        %854 = vmax.xlane.f32.xlu0 %v853
        %v855 = vpop.xlane.xlu0 %854
        %v856 = vsub.f32 %v848, %v852
        %v857 = vsub.f32 %v849, %v855
        %v858 = vmul.f32 %v856, 1.442695
        %v859 = vpow.pop %v858
        %v860 = vmul.f32 %v857, 1.442695
        %v861 = vpow.pop %v860
        %v862 = vsel %vm802, %v859, 0.0
        %863 = vadd.xlane.f32.xlu0 %v862
        %v864 = vpop.xlane.xlu0 %863
        %v865 = vsel %vm802, %v861, 0.0
        %866 = vadd.xlane.f32.xlu0 %v865
        %v867 = vpop.xlane.xlu0 %866
        %v868 = vrcp.pop %v864
        %v869 = vrcp.pop %v867
        %v870 = vmul.f32 %v859, %v868
        %v871 = vmul.f32 %v861, %v869
        %v872 = vpack.c.bf16 %v870, %v870
        %v873 = vpack.c.bf16 %v871, %v871
        %874 = vrot.lane.b32.xlu0 %v799, 64
        %v875 = vpop.permute.xlu0 %874
        %v877 = vsel %vm802, %v872, 0
        %vm879 = vcmask 1043456
        %v881 = vsel %vm879, %v875, 0
        %883 = vmatpush.bf16.msra.mxu0 0
        %884 = vmatpush.bf16.msra.mxu0 0
        %885 = vmatpush.bf16.msra.mxu0 0
        %886 = vmatpush.bf16.msra.mxu0 0
        %887 = vmatpush.bf16.msra.mxu0 0
        %888 = vmatpush.bf16.msra.mxu0 0
        %889 = vmatpush.bf16.msra.mxu0 0
        %890 = vmatpush.bf16.msra.mxu0 %v881
        %891 = vmatmul.bf16.gmra.mxu0 %v877
        %v892 = vpop.f32.mrf.mxu0
        %v893 = vadd.f32 0.0, %v892
        %v894 = vpop.f32.mrf.mxu0
        %895 = vdwg.mxu0
        %896 = vrot.lane.b32.xlu0 %v824, 64
        %v897 = vpop.permute.xlu0 %896
        %v899 = vsel %vm802, %v873, 0
        %v902 = vsel %vm879, %v897, 0
        %904 = vmatpush.bf16.msra.mxu0 0
        %905 = vmatpush.bf16.msra.mxu0 0
        %906 = vmatpush.bf16.msra.mxu0 0
        %907 = vmatpush.bf16.msra.mxu0 0
        %908 = vmatpush.bf16.msra.mxu0 0
        %909 = vmatpush.bf16.msra.mxu0 0
        %910 = vmatpush.bf16.msra.mxu0 0
        %911 = vmatpush.bf16.msra.mxu0 %v902
        %912 = vmatmul.bf16.gmra.mxu0 %v899
        %v913 = vpop.f32.mrf.mxu0
        %v914 = vadd.f32 0.0, %v913
        %v915 = vpop.f32.mrf.mxu0
        %916 = vdwg.mxu0
        %917 = vst.msk [vmem:[#allocation3] sm:$0xff] %vm802, %v893
        %918 = vst.msk [vmem:[#allocation3 + $0x8] sm:$0xff] %vm802, %v914
        %919 = vrot.lane.b32.xlu0 %v799, 120
        %v920 = vpop.permute.xlu0 %919
        %921 = vrot.lane.b32.xlu0 %v799, 88
        %v922 = vpop.permute.xlu0 %921
        %v924 = vsel %vm802, %v920, 0
        %v927 = vsel %vm802, %v922, 0
        %929 = vmatpush.bf16.xpose.msra.mxu0 0
        %930 = vmatpush.bf16.xpose.msra.mxu0 0
        %931 = vmatpush.bf16.xpose.msra.mxu0 0
        %932 = vmatpush.bf16.xpose.msra.mxu0 0
        %933 = vmatpush.bf16.xpose.msra.mxu0 0
        %934 = vmatpush.bf16.xpose.msra.mxu0 0
        %935 = vmatpush.bf16.xpose.msra.mxu0 0
        %936 = vmatpush.bf16.xpose.msra.mxu0 %v927
        %937 = vmatmul.bf16.gmra.mxu0 %v924
        %v938 = vpop.f32.mrf.mxu0
        %v939 = vadd.f32 0.0, %v938
        %v940 = vpop.f32.mrf.mxu0
        %941 = vdwg.mxu0
        %942 = vrot.lane.b32.xlu0 %v824, 120
        %v943 = vpop.permute.xlu0 %942
        %944 = vrot.lane.b32.xlu0 %v824, 88
        %v945 = vpop.permute.xlu0 %944
        %v947 = vsel %vm802, %v943, 0
        %v950 = vsel %vm802, %v945, 0
        %952 = vmatpush.bf16.xpose.msra.mxu0 0
        %953 = vmatpush.bf16.xpose.msra.mxu0 0
        %954 = vmatpush.bf16.xpose.msra.mxu0 0
        %955 = vmatpush.bf16.xpose.msra.mxu0 0
        %956 = vmatpush.bf16.xpose.msra.mxu0 0
        %957 = vmatpush.bf16.xpose.msra.mxu0 0
        %958 = vmatpush.bf16.xpose.msra.mxu0 0
        %959 = vmatpush.bf16.xpose.msra.mxu0 %v950
        %960 = vmatmul.bf16.gmra.mxu0 %v947
        %v961 = vpop.f32.mrf.mxu0
        %v962 = vadd.f32 0.0, %v961
        %v963 = vpop.f32.mrf.mxu0
        %964 = vdwg.mxu0
        %v965 = vmul.f32 %v939, 0.35355338
        %v966 = vmul.f32 %v962, 0.35355338
        %v967 = vsel %vm794, -3.4028235e+38, %v965
        %v968 = vsel %vm794, -3.4028235e+38, %v966
        %v969 = vsel %vm802, %v967, -inf
        %970 = vmax.xlane.f32.xlu0 %v969
        %v971 = vpop.xlane.xlu0 %970
        %v972 = vsel %vm802, %v968, -inf
        %973 = vmax.xlane.f32.xlu0 %v972
        %v974 = vpop.xlane.xlu0 %973
        %v975 = vsub.f32 %v967, %v971
        %v976 = vsub.f32 %v968, %v974
        %v977 = vmul.f32 %v975, 1.442695
        %v978 = vpow.pop %v977
        %v979 = vmul.f32 %v976, 1.442695
        %v980 = vpow.pop %v979
        %v981 = vsel %vm802, %v978, 0.0
        %982 = vadd.xlane.f32.xlu0 %v981
        %v983 = vpop.xlane.xlu0 %982
        %v984 = vsel %vm802, %v980, 0.0
        %985 = vadd.xlane.f32.xlu0 %v984
        %v986 = vpop.xlane.xlu0 %985
        %v987 = vrcp.pop %v983
        %v988 = vrcp.pop %v986
        %v989 = vmul.f32 %v978, %v987
        %v990 = vmul.f32 %v980, %v988
        %v991 = vpack.c.bf16 %v989, %v989
        %v992 = vpack.c.bf16 %v990, %v990
        %993 = vrot.lane.b32.xlu0 %v799, 56
        %v994 = vpop.permute.xlu0 %993
        %v996 = vsel %vm802, %v991, 0
        %v999 = vsel %vm879, %v994, 0
        %1001 = vmatpush.bf16.msra.mxu0 0
        %1002 = vmatpush.bf16.msra.mxu0 0
        %1003 = vmatpush.bf16.msra.mxu0 0
        %1004 = vmatpush.bf16.msra.mxu0 0
        %1005 = vmatpush.bf16.msra.mxu0 0
        %1006 = vmatpush.bf16.msra.mxu0 0
        %1007 = vmatpush.bf16.msra.mxu0 0
        %1008 = vmatpush.bf16.msra.mxu0 %v999
        %1009 = vmatmul.bf16.gmra.mxu0 %v996
        %v1010 = vpop.f32.mrf.mxu0
        %v1011 = vadd.f32 0.0, %v1010
        %v1012 = vpop.f32.mrf.mxu0
        %1013 = vdwg.mxu0
        %1014 = vrot.lane.b32.xlu0 %v824, 56
        %v1015 = vpop.permute.xlu0 %1014
        %v1017 = vsel %vm802, %v992, 0
        %v1020 = vsel %vm879, %v1015, 0
        %1022 = vmatpush.bf16.msra.mxu0 0
        %1023 = vmatpush.bf16.msra.mxu0 0
        %1024 = vmatpush.bf16.msra.mxu0 0
        %1025 = vmatpush.bf16.msra.mxu0 0
        %1026 = vmatpush.bf16.msra.mxu0 0
        %1027 = vmatpush.bf16.msra.mxu0 0
        %1028 = vmatpush.bf16.msra.mxu0 0
        %1029 = vmatpush.bf16.msra.mxu0 %v1020
        %1030 = vmatmul.bf16.gmra.mxu0 %v1017
        %v1031 = vpop.f32.mrf.mxu0
        %v1032 = vadd.f32 0.0, %v1031
        %v1033 = vpop.f32.mrf.mxu0
        %1034 = vdwg.mxu0
        %1037 = vrot.lane.b32.xlu0 %v1011, 8
        %v1038 = vpop.permute.xlu0 %1037
        %1039 = vrot.lane.b32.xlu0 %v1032, 8
        %v1040 = vpop.permute.xlu0 %1039
        %vm1043 = vcmask 130112
        %1044 = vst.msk [vmem:[#allocation3] sm:$0xff] %vm1043, %v1038
        %1045 = vst.msk [vmem:[#allocation3 + $0x8] sm:$0xff] %vm1043, %v1040
        %1046 = vrot.lane.b32.xlu0 %v799, 112
        %v1047 = vpop.permute.xlu0 %1046
        %1048 = vrot.lane.b32.xlu0 %v799, 80
        %v1049 = vpop.permute.xlu0 %1048
        %v1051 = vsel %vm802, %v1047, 0
        %v1054 = vsel %vm802, %v1049, 0
        %1056 = vmatpush.bf16.xpose.msra.mxu0 0
        %1057 = vmatpush.bf16.xpose.msra.mxu0 0
        %1058 = vmatpush.bf16.xpose.msra.mxu0 0
        %1059 = vmatpush.bf16.xpose.msra.mxu0 0
        %1060 = vmatpush.bf16.xpose.msra.mxu0 0
        %1061 = vmatpush.bf16.xpose.msra.mxu0 0
        %1062 = vmatpush.bf16.xpose.msra.mxu0 0
        %1063 = vmatpush.bf16.xpose.msra.mxu0 %v1054
        %1064 = vmatmul.bf16.gmra.mxu0 %v1051
        %v1065 = vpop.f32.mrf.mxu0
        %v1066 = vadd.f32 0.0, %v1065
        %v1067 = vpop.f32.mrf.mxu0
        %1068 = vdwg.mxu0
        %1069 = vrot.lane.b32.xlu0 %v824, 112
        %v1070 = vpop.permute.xlu0 %1069
        %1071 = vrot.lane.b32.xlu0 %v824, 80
        %v1072 = vpop.permute.xlu0 %1071
        %v1074 = vsel %vm802, %v1070, 0
        %v1077 = vsel %vm802, %v1072, 0
        %1079 = vmatpush.bf16.xpose.msra.mxu0 0
        %1080 = vmatpush.bf16.xpose.msra.mxu0 0
        %1081 = vmatpush.bf16.xpose.msra.mxu0 0
        %1082 = vmatpush.bf16.xpose.msra.mxu0 0
        %1083 = vmatpush.bf16.xpose.msra.mxu0 0
        %1084 = vmatpush.bf16.xpose.msra.mxu0 0
        %1085 = vmatpush.bf16.xpose.msra.mxu0 0
        %1086 = vmatpush.bf16.xpose.msra.mxu0 %v1077
        %1087 = vmatmul.bf16.gmra.mxu0 %v1074
        %v1088 = vpop.f32.mrf.mxu0
        %v1089 = vadd.f32 0.0, %v1088
        %v1090 = vpop.f32.mrf.mxu0
        %1091 = vdwg.mxu0
        %v1092 = vmul.f32 %v1066, 0.35355338
        %v1093 = vmul.f32 %v1089, 0.35355338
        %v1094 = vsel %vm794, -3.4028235e+38, %v1092
        %v1095 = vsel %vm794, -3.4028235e+38, %v1093
        %v1096 = vsel %vm802, %v1094, -inf
        %1097 = vmax.xlane.f32.xlu0 %v1096
        %v1098 = vpop.xlane.xlu0 %1097
        %v1099 = vsel %vm802, %v1095, -inf
        %1100 = vmax.xlane.f32.xlu0 %v1099
        %v1101 = vpop.xlane.xlu0 %1100
        %v1102 = vsub.f32 %v1094, %v1098
        %v1103 = vsub.f32 %v1095, %v1101
        %v1104 = vmul.f32 %v1102, 1.442695
        %v1105 = vpow.pop %v1104
        %v1106 = vmul.f32 %v1103, 1.442695
        %v1107 = vpow.pop %v1106
        %v1108 = vsel %vm802, %v1105, 0.0
        %1109 = vadd.xlane.f32.xlu0 %v1108
        %v1110 = vpop.xlane.xlu0 %1109
        %v1111 = vsel %vm802, %v1107, 0.0
        %1112 = vadd.xlane.f32.xlu0 %v1111
        %v1113 = vpop.xlane.xlu0 %1112
        %v1114 = vrcp.pop %v1110
        %v1115 = vrcp.pop %v1113
        %v1116 = vmul.f32 %v1105, %v1114
        %v1117 = vmul.f32 %v1107, %v1115
        %v1118 = vpack.c.bf16 %v1116, %v1116
        %v1119 = vpack.c.bf16 %v1117, %v1117
        %1120 = vrot.lane.b32.xlu0 %v799, 48
        %v1121 = vpop.permute.xlu0 %1120
        %v1123 = vsel %vm802, %v1118, 0
        %v1126 = vsel %vm879, %v1121, 0
        %1128 = vmatpush.bf16.msra.mxu0 0
        %1129 = vmatpush.bf16.msra.mxu0 0
        %1130 = vmatpush.bf16.msra.mxu0 0
        %1131 = vmatpush.bf16.msra.mxu0 0
        %1132 = vmatpush.bf16.msra.mxu0 0
        %1133 = vmatpush.bf16.msra.mxu0 0
        %1134 = vmatpush.bf16.msra.mxu0 0
        %1135 = vmatpush.bf16.msra.mxu0 %v1126
        %1136 = vmatmul.bf16.gmra.mxu0 %v1123
        %v1137 = vpop.f32.mrf.mxu0
        %v1138 = vadd.f32 0.0, %v1137
        %v1139 = vpop.f32.mrf.mxu0
        %1140 = vdwg.mxu0
        %1141 = vrot.lane.b32.xlu0 %v824, 48
        %v1142 = vpop.permute.xlu0 %1141
        %v1144 = vsel %vm802, %v1119, 0
        %v1147 = vsel %vm879, %v1142, 0
        %1149 = vmatpush.bf16.msra.mxu0 0
        %1150 = vmatpush.bf16.msra.mxu0 0
        %1151 = vmatpush.bf16.msra.mxu0 0
        %1152 = vmatpush.bf16.msra.mxu0 0
        %1153 = vmatpush.bf16.msra.mxu0 0
        %1154 = vmatpush.bf16.msra.mxu0 0
        %1155 = vmatpush.bf16.msra.mxu0 0
        %1156 = vmatpush.bf16.msra.mxu0 %v1147
        %1157 = vmatmul.bf16.gmra.mxu0 %v1144
        %v1158 = vpop.f32.mrf.mxu0
        %v1159 = vadd.f32 0.0, %v1158
        %v1160 = vpop.f32.mrf.mxu0
        %1161 = vdwg.mxu0
        %1164 = vrot.lane.b32.xlu0 %v1138, 16
        %v1165 = vpop.permute.xlu0 %1164
        %1166 = vrot.lane.b32.xlu0 %v1159, 16
        %v1167 = vpop.permute.xlu0 %1166
        %vm1170 = vcmask 195712
        %1171 = vst.msk [vmem:[#allocation3] sm:$0xff] %vm1170, %v1165
        %1172 = vst.msk [vmem:[#allocation3 + $0x8] sm:$0xff] %vm1170, %v1167
        %1173 = vrot.lane.b32.xlu0 %v799, 104
        %v1174 = vpop.permute.xlu0 %1173
        %1175 = vrot.lane.b32.xlu0 %v799, 72
        %v1176 = vpop.permute.xlu0 %1175
        %v1178 = vsel %vm802, %v1174, 0
        %v1181 = vsel %vm802, %v1176, 0
        %1183 = vmatpush.bf16.xpose.msra.mxu0 0
        %1184 = vmatpush.bf16.xpose.msra.mxu0 0
        %1185 = vmatpush.bf16.xpose.msra.mxu0 0
        %1186 = vmatpush.bf16.xpose.msra.mxu0 0
        %1187 = vmatpush.bf16.xpose.msra.mxu0 0
        %1188 = vmatpush.bf16.xpose.msra.mxu0 0
        %1189 = vmatpush.bf16.xpose.msra.mxu0 0
        %1190 = vmatpush.bf16.xpose.msra.mxu0 %v1181
        %1191 = vmatmul.bf16.gmra.mxu0 %v1178
        %v1192 = vpop.f32.mrf.mxu0
        %v1193 = vadd.f32 0.0, %v1192
        %v1194 = vpop.f32.mrf.mxu0
        %1195 = vdwg.mxu0
        %1196 = vrot.lane.b32.xlu0 %v824, 104
        %v1197 = vpop.permute.xlu0 %1196
        %1198 = vrot.lane.b32.xlu0 %v824, 72
        %v1199 = vpop.permute.xlu0 %1198
        %v1201 = vsel %vm802, %v1197, 0
        %v1204 = vsel %vm802, %v1199, 0
        %1206 = vmatpush.bf16.xpose.msra.mxu0 0
        %1207 = vmatpush.bf16.xpose.msra.mxu0 0
        %1208 = vmatpush.bf16.xpose.msra.mxu0 0
        %1209 = vmatpush.bf16.xpose.msra.mxu0 0
        %1210 = vmatpush.bf16.xpose.msra.mxu0 0
        %1211 = vmatpush.bf16.xpose.msra.mxu0 0
        %1212 = vmatpush.bf16.xpose.msra.mxu0 0
        %1213 = vmatpush.bf16.xpose.msra.mxu0 %v1204
        %1214 = vmatmul.bf16.gmra.mxu0 %v1201
        %v1215 = vpop.f32.mrf.mxu0
        %v1216 = vadd.f32 0.0, %v1215
        %v1217 = vpop.f32.mrf.mxu0
        %1218 = vdwg.mxu0
        %v1219 = vmul.f32 %v1193, 0.35355338
        %v1220 = vmul.f32 %v1216, 0.35355338
        %v1221 = vsel %vm794, -3.4028235e+38, %v1219
        %v1222 = vsel %vm794, -3.4028235e+38, %v1220
        %v1223 = vsel %vm802, %v1221, -inf
        %1224 = vmax.xlane.f32.xlu0 %v1223
        %v1225 = vpop.xlane.xlu0 %1224
        %v1226 = vsel %vm802, %v1222, -inf
        %1227 = vmax.xlane.f32.xlu0 %v1226
        %v1228 = vpop.xlane.xlu0 %1227
        %v1229 = vsub.f32 %v1221, %v1225
        %v1230 = vsub.f32 %v1222, %v1228
        %v1231 = vmul.f32 %v1229, 1.442695
        %v1232 = vpow.pop %v1231
        %v1233 = vmul.f32 %v1230, 1.442695
        %v1234 = vpow.pop %v1233
        %v1235 = vsel %vm802, %v1232, 0.0
        %1236 = vadd.xlane.f32.xlu0 %v1235
        %v1237 = vpop.xlane.xlu0 %1236
        %v1238 = vsel %vm802, %v1234, 0.0
        %1239 = vadd.xlane.f32.xlu0 %v1238
        %v1240 = vpop.xlane.xlu0 %1239
        %v1241 = vrcp.pop %v1237
        %v1242 = vrcp.pop %v1240
        %v1243 = vmul.f32 %v1232, %v1241
        %v1244 = vmul.f32 %v1234, %v1242
        %v1245 = vpack.c.bf16 %v1243, %v1243
        %v1246 = vpack.c.bf16 %v1244, %v1244
        %1247 = vrot.lane.b32.xlu0 %v799, 40
        %v1248 = vpop.permute.xlu0 %1247
        %v1250 = vsel %vm802, %v1245, 0
        %v1253 = vsel %vm879, %v1248, 0
        %1255 = vmatpush.bf16.msra.mxu0 0
        %1256 = vmatpush.bf16.msra.mxu0 0
        %1257 = vmatpush.bf16.msra.mxu0 0
        %1258 = vmatpush.bf16.msra.mxu0 0
        %1259 = vmatpush.bf16.msra.mxu0 0
        %1260 = vmatpush.bf16.msra.mxu0 0
        %1261 = vmatpush.bf16.msra.mxu0 0
        %1262 = vmatpush.bf16.msra.mxu0 %v1253
        %1263 = vmatmul.bf16.gmra.mxu0 %v1250
        %v1264 = vpop.f32.mrf.mxu0
        %v1265 = vadd.f32 0.0, %v1264
        %v1266 = vpop.f32.mrf.mxu0
        %1267 = vdwg.mxu0
        %1268 = vrot.lane.b32.xlu0 %v824, 40
        %v1269 = vpop.permute.xlu0 %1268
        %v1271 = vsel %vm802, %v1246, 0
        %v1274 = vsel %vm879, %v1269, 0
        %1276 = vmatpush.bf16.msra.mxu0 0
        %1277 = vmatpush.bf16.msra.mxu0 0
        %1278 = vmatpush.bf16.msra.mxu0 0
        %1279 = vmatpush.bf16.msra.mxu0 0
        %1280 = vmatpush.bf16.msra.mxu0 0
        %1281 = vmatpush.bf16.msra.mxu0 0
        %1282 = vmatpush.bf16.msra.mxu0 0
        %1283 = vmatpush.bf16.msra.mxu0 %v1274
        %1284 = vmatmul.bf16.gmra.mxu0 %v1271
        %v1285 = vpop.f32.mrf.mxu0
        %v1286 = vadd.f32 0.0, %v1285
        %v1287 = vpop.f32.mrf.mxu0
        %1288 = vdwg.mxu0
        %1291 = vrot.lane.b32.xlu0 %v1265, 24
        %v1292 = vpop.permute.xlu0 %1291
        %1293 = vrot.lane.b32.xlu0 %v1286, 24
        %v1294 = vpop.permute.xlu0 %1293
        %vm1297 = vcmask 261312
        %1298 = vst.msk [vmem:[#allocation3] sm:$0xff] %vm1297, %v1292
        %1299 = vst.msk [vmem:[#allocation3 + $0x8] sm:$0xff] %vm1297, %v1294
        %v1300 = vld [vmem:[#allocation3] sm:$0xff]
        %v1301 = vld [vmem:[#allocation3 + $0x8] sm:$0xff]
        %v1302 = vpack.c.bf16 %v1301, %v1300
        %v1303 = vld [vmem:[%s646] sm:$0xf]
        %v1304 = vld [vmem:[%s646 + $0x4] sm:$0xf]
        %v1305 = vld [vmem:[%s646 + $0x8] sm:$0xf]
        %v1306 = vld [vmem:[%s646 + $0xc] sm:$0xf]
        %v1307 = vld [vmem:[%s649] sm:$0x1]
        %v1309 = vperm.slane %v1307, 0
        %v1315 = vunpack.c.l.b16 %v1303
        %v1316 = vunpack.c.l.b16 %v1304
        %v1317 = vunpack.c.l.b16 %v1305
        %v1318 = vunpack.c.l.b16 %v1306
        %v1319 = vpack.c.b16 %v1316, %v1315
        %v1320 = vpack.c.b16 %v1318, %v1317
        %v1324 = vsel %vm690, %v1302, 0
        %1326 = vmatpush.bf16.msra.mxu0 0
        %1327 = vmatpush.bf16.msra.mxu0 0
        %1328 = vmatpush.bf16.msra.mxu0 0
        %1329 = vmatpush.bf16.msra.mxu0 0
        %1330 = vmatpush.bf16.msra.mxu0 0
        %1331 = vmatpush.bf16.msra.mxu0 0
        %1332 = vmatpush.bf16.msra.mxu0 %v1320
        %1333 = vmatpush.bf16.msra.mxu0 %v1319
        %1334 = vmatmul.bf16.gmra.mxu0 %v1324
        %v1335 = vpop.f32.mrf.mxu0
        %v1336 = vadd.f32 %v1309, %v1335
        %v1337 = vpop.f32.mrf.mxu0
        %v1338 = vadd.f32 %v1309, %v1337
        %1339 = vdwg.mxu0
        %v1340 = vadd.f32 %v686, %v1336
        %v1341 = vadd.f32 %v687, %v1338
        %v1342 = vld [vmem:[%s652] sm:$0x1]
        %v1343 = vld [vmem:[%s655] sm:$0x1]
        %v1344 = vsel %vm690, %v1340, 0.0
        %1345 = vadd.xlane.f32.xlu0 %v1344
        %v1346 = vpop.xlane.xlu0 %1345
        %v1347 = vsel %vm690, %v1341, 0.0
        %1348 = vadd.xlane.f32.xlu0 %v1347
        %v1349 = vpop.xlane.xlu0 %1348
        %v1350 = vmul.f32 %v1346, %v703
        %v1351 = vmul.f32 %v1349, %v703
        %v1352 = vsub.f32 %v1340, %v1350
        %v1353 = vsub.f32 %v1341, %v1351
        %v1354 = vmul.f32 %v1352, %v1352
        %v1355 = vmul.f32 %v1353, %v1353
        %v1356 = vsel %vm690, %v1354, 0.0
        %1357 = vadd.xlane.f32.xlu0 %v1356
        %v1358 = vpop.xlane.xlu0 %1357
        %v1359 = vsel %vm690, %v1355, 0.0
        %1360 = vadd.xlane.f32.xlu0 %v1359
        %v1361 = vpop.xlane.xlu0 %1360
        %v1362 = vmul.f32 %v1358, %v703
        %v1363 = vmul.f32 %v1361, %v703
        %v1364 = vadd.f32 %v1362, 1e-05
        %v1365 = vadd.f32 %v1363, 1e-05
        %v1366 = vrsqrt.pop %v1364
        %v1367 = vmul.f32 %v1366, %v1364
        %v1368 = vmul.f32 %v1367, %v1366
        %v1369 = vmul.f32 0.5, %v1368
        %v1370 = vsub.f32 1.5, %v1369
        %v1371 = vmul.f32 %v1366, %v1370
        %vm1372 = vweird.f32 %v1364
        %vm1373 = vweird.f32 %v1366
        %vm1374 = vmor %vm1372, %vm1373
        %v1375 = vsel %vm1374, %v1366, %v1371
        %v1376 = vrsqrt.pop %v1365
        %v1377 = vmul.f32 %v1376, %v1365
        %v1378 = vmul.f32 %v1377, %v1376
        %v1379 = vmul.f32 0.5, %v1378
        %v1380 = vsub.f32 1.5, %v1379
        %v1381 = vmul.f32 %v1376, %v1380
        %vm1382 = vweird.f32 %v1365
        %vm1383 = vweird.f32 %v1376
        %vm1384 = vmor %vm1382, %vm1383
        %v1385 = vsel %vm1384, %v1376, %v1381
        %v1386 = vmul.f32 %v1352, %v1375
        %v1387 = vmul.f32 %v1353, %v1385
        %v1389 = vperm.slane %v1342, 0
        %v1391 = vmul.f32 %v1386, %v1389
        %v1392 = vmul.f32 %v1387, %v1389
        %v1394 = vperm.slane %v1343, 0
        %v1396 = vadd.f32 %v1391, %v1394
        %v1397 = vadd.f32 %v1392, %v1394
        %v1398 = vpack.c.bf16 %v1397, %v1396
        %v1399 = vld [vmem:[%s660] sm:$0xf]
        %v1400 = vld [vmem:[%s660 + $0x4] sm:$0xf]
        %v1401 = vld [vmem:[%s660 + $0x8] sm:$0xf]
        %v1402 = vld [vmem:[%s660 + $0xc] sm:$0xf]
        %v1403 = vld [vmem:[%s663] sm:$0x1]
        %v1405 = vperm.slane %v1403, 0
        %v1411 = vunpack.c.l.b16 %v1399
        %v1412 = vunpack.c.l.b16 %v1400
        %v1413 = vunpack.c.l.b16 %v1401
        %v1414 = vunpack.c.l.b16 %v1402
        %v1415 = vpack.c.b16 %v1412, %v1411
        %v1416 = vpack.c.b16 %v1414, %v1413
        %v1420 = vsel %vm690, %v1398, 0
        %1422 = vmatpush.bf16.msra.mxu0 0
        %1423 = vmatpush.bf16.msra.mxu0 0
        %1424 = vmatpush.bf16.msra.mxu0 0
        %1425 = vmatpush.bf16.msra.mxu0 0
        %1426 = vmatpush.bf16.msra.mxu0 0
        %1427 = vmatpush.bf16.msra.mxu0 0
        %1428 = vmatpush.bf16.msra.mxu0 %v1416
        %1429 = vmatpush.bf16.msra.mxu0 %v1415
        %1430 = vmatmul.bf16.gmra.mxu0 %v1420
        %v1431 = vpop.f32.mrf.mxu0
        %v1432 = vadd.f32 %v1405, %v1431
        %v1433 = vpop.f32.mrf.mxu0
        %v1434 = vadd.f32 %v1405, %v1433
        %1435 = vdwg.mxu0
        %v1436 = vmul.f32 %v1432, 1.702
        %v1437 = vmul.f32 %v1434, 1.702
        %v1438 = vxor.u32 %v1436, 2147483648
        %v1439 = vxor.u32 %v1437, 2147483648
        %v1440 = vmul.f32 %v1438, 1.442695
        %v1441 = vpow.pop %v1440
        %v1442 = vmul.f32 %v1439, 1.442695
        %v1443 = vpow.pop %v1442
        %v1444 = vadd.f32 %v1441, 1.0
        %v1445 = vadd.f32 %v1443, 1.0
        %v1446 = vrcp.pop %v1444
        %v1447 = vmul.f32 %v1444, %v1446
        %v1448 = vsub.f32 1.0, %v1447
        %v1449 = vmul.f32 %v1446, %v1448
        %v1450 = vadd.f32 %v1446, %v1449
        %vm1451 = vweird.f32 %v1444
        %vm1452 = vweird.f32 %v1446
        %vm1453 = vmor %vm1451, %vm1452
        %v1454 = vsel %vm1453, %v1446, %v1450
        %v1455 = vand.u32 2147483647, %v1444
        %vm1456 = vcmp.eq.f32.partialorder %v1455, 8.507059e+37
        %v1457 = vand.u32 %v1444, 2147483648
        %v1458 = vor.u32 1.1754944e-38, %v1457
        %v1459 = vsel %vm1456, %v1458, %v1454
        %v1460 = vmul.f32 1.0, %v1459
        %v1461 = vrcp.pop %v1445
        %v1462 = vmul.f32 %v1445, %v1461
        %v1463 = vsub.f32 1.0, %v1462
        %v1464 = vmul.f32 %v1461, %v1463
        %v1465 = vadd.f32 %v1461, %v1464
        %vm1466 = vweird.f32 %v1445
        %vm1467 = vweird.f32 %v1461
        %vm1468 = vmor %vm1466, %vm1467
        %v1469 = vsel %vm1468, %v1461, %v1465
        %v1470 = vand.u32 2147483647, %v1445
        %vm1471 = vcmp.eq.f32.partialorder %v1470, 8.507059e+37
        %v1472 = vand.u32 %v1445, 2147483648
        %v1473 = vor.u32 1.1754944e-38, %v1472
        %v1474 = vsel %vm1471, %v1473, %v1469
        %v1475 = vmul.f32 1.0, %v1474
        %v1476 = vmul.f32 %v1432, %v1460
        %v1477 = vmul.f32 %v1434, %v1475
        %v1478 = vpack.c.bf16 %v1477, %v1476
        %v1479 = vld [vmem:[%s668] sm:$0xf]
        %v1480 = vld [vmem:[%s668 + $0x4] sm:$0xf]
        %v1481 = vld [vmem:[%s668 + $0x8] sm:$0xf]
        %v1482 = vld [vmem:[%s668 + $0xc] sm:$0xf]
        %v1483 = vld [vmem:[%s668 + $0x10] sm:$0xf]
        %v1484 = vld [vmem:[%s668 + $0x14] sm:$0xf]
        %v1485 = vld [vmem:[%s668 + $0x18] sm:$0xf]
        %v1486 = vld [vmem:[%s668 + $0x1c] sm:$0xf]
        %v1487 = vld [vmem:[%s668 + $0x20] sm:$0xf]
        %v1488 = vld [vmem:[%s668 + $0x24] sm:$0xf]
        %v1489 = vld [vmem:[%s668 + $0x28] sm:$0xf]
        %v1490 = vld [vmem:[%s668 + $0x2c] sm:$0xf]
        %v1491 = vld [vmem:[%s668 + $0x30] sm:$0xf]
        %v1492 = vld [vmem:[%s668 + $0x34] sm:$0xf]
        %v1493 = vld [vmem:[%s668 + $0x38] sm:$0xf]
        %v1494 = vld [vmem:[%s668 + $0x3c] sm:$0xf]
        %v1495 = vld [vmem:[%s671] sm:$0x1]
        %v1497 = vperm.slane %v1495, 0
        %v1515 = vunpack.c.l.b16 %v1479
        %v1516 = vunpack.c.l.b16 %v1480
        %v1517 = vunpack.c.l.b16 %v1481
        %v1518 = vunpack.c.l.b16 %v1482
        %v1519 = vunpack.c.l.b16 %v1483
        %v1520 = vunpack.c.l.b16 %v1484
        %v1521 = vunpack.c.l.b16 %v1485
        %v1522 = vunpack.c.l.b16 %v1486
        %v1523 = vunpack.c.l.b16 %v1487
        %v1524 = vunpack.c.l.b16 %v1488
        %v1525 = vunpack.c.l.b16 %v1489
        %v1526 = vunpack.c.l.b16 %v1490
        %v1527 = vunpack.c.l.b16 %v1491
        %v1528 = vunpack.c.l.b16 %v1492
        %v1529 = vunpack.c.l.b16 %v1493
        %v1530 = vunpack.c.l.b16 %v1494
        %v1531 = vpack.c.b16 %v1516, %v1515
        %v1532 = vpack.c.b16 %v1518, %v1517
        %v1533 = vpack.c.b16 %v1520, %v1519
        %v1534 = vpack.c.b16 %v1522, %v1521
        %v1535 = vpack.c.b16 %v1524, %v1523
        %v1536 = vpack.c.b16 %v1526, %v1525
        %v1537 = vpack.c.b16 %v1528, %v1527
        %v1538 = vpack.c.b16 %v1530, %v1529
        %1547 = vmatpush.bf16.msra.mxu0 %v1538
        %1548 = vmatpush.bf16.msra.mxu0 %v1537
        %1549 = vmatpush.bf16.msra.mxu0 %v1536
        %1550 = vmatpush.bf16.msra.mxu0 %v1535
        %1551 = vmatpush.bf16.msra.mxu0 %v1534
        %1552 = vmatpush.bf16.msra.mxu0 %v1533
        %1553 = vmatpush.bf16.msra.mxu0 %v1532
        %1554 = vmatpush.bf16.msra.mxu0 %v1531
        %1555 = vmatmul.bf16.gmra.mxu0 %v1478
        %v1556 = vpop.f32.mrf.mxu0
        %v1557 = vadd.f32 %v1497, %v1556
        %v1558 = vpop.f32.mrf.mxu0
        %v1559 = vadd.f32 %v1497, %v1558
        %1560 = vdwg.mxu0
        %v1561 = vadd.f32 %v1340, %v1557
        %v1562 = vadd.f32 %v1341, %v1559
        %1563 = vst.msk [vmem:[#allocation2] sm:$0xff] %vm690, %v1561
        %1564 = vst.msk [vmem:[#allocation2 + $0x8] sm:$0xff] %vm690, %v1562
        %p1565 = scmp.eq.s32.totalorder %s33, 1
        // Predicated region
        $region81: #{tpu_custom_call.1} parent=75 // pred_check
          %p1566 = pneg %p1565
        $region82: #{tpu_custom_call.1} parent=75 // pred_check_branch
          %1568 = sbr.rel (%p1566) target = $region84
        $region83: #{tpu_custom_call.1} parent=75 // pred_region
          %v1569 = vld [vmem:[#allocation2] sm:$0xff]
          %v1570 = vld [vmem:[#allocation2 + $0x8] sm:$0xff]
          %1571 = vst.msk [vmem:[%s621] sm:$0xff] %vm690, %v1569
          %1572 = vst.msk [vmem:[%s621 + $0x8] sm:$0xff] %vm690, %v1570
        $region84: #{tpu_custom_call.1} parent=75 // pred_fallthru
          _
        %s1573 = sand.u32 %s407, 1
        %s1574 = scalar_lea.sflag [#allocation5], %s1573
        %s1575 = sand.u32 %s407, 1
        %s1576 = smul.addr %s1575, 16
        %s1577 = scalar_lea.vmem [#allocation4], %s1576
        // Predicated region
        $region85: #{tpu_custom_call.1} parent=75 // pred_check
          %p1578 = pneg %p417
        $region86: #{tpu_custom_call.1} parent=75 // pred_check_branch
          %1580 = sbr.rel (%p1578) target = $region88
        $region87: #{tpu_custom_call.1} parent=75 // pred_region
          %s1581 = smul.u32 2, %s32
          %1583 = vsyncadd %s1574, 0
          %s1584 = smul.addr %s1581, 8
          %s1585 = scalar_lea.hbm %s14, %s1584
          %s1586 = sshll.u32 %s1577, 4
          %s1587 = int_to_ptr.vmem [resolvable:$true] %s1586
          %s1588 = sshll.u32 %s1585, 4
          %s1589 = int_to_ptr.hbm [resolvable:$true] %s1588
          %1594 = dma.vmem_to_hbm [thread:$0]  %s1587, 256, %s1589, %s1574, 128, 128, 8
        $region88: #{tpu_custom_call.1} parent=75 // pred_fallthru
          _
      $region76: #{tpu_custom_call.1} parent=5 // pred_fallthru
        _
      %p1595 = scmp.le.s32.totalorder 2, %s23
      // Predicated region
      $region89: #{tpu_custom_call.1} parent=5 // pred_check
        %p1596 = pneg %p1595
      $region90: #{tpu_custom_call.1} parent=5 // pred_check_branch
        %1598 = sbr.rel (%p1596) target = $region92
      $region91: #{tpu_custom_call.1} parent=5 // pred_region
        %s1599 = ssub.s32 %s23, 2
        // Predicated region
        $region93: #{tpu_custom_call.1} parent=91 // pred_check
          %p1600 = pneg %p423
        $region94: #{tpu_custom_call.1} parent=91 // pred_check_branch
          %1602 = sbr.rel (%p1600) target = $region96
        $region95: #{tpu_custom_call.1} parent=91 // pred_region
          %s1603 = sand.u32 %s408, 1
          %s1604 = scalar_lea.sflag [#allocation5], %s1603
          %s1605 = sand.u32 %s408, 1
          %s1606 = smul.addr %s1605, 16
          %s1607 = scalar_lea.vmem [#allocation4], %s1606
          %1609 = dma.done %s1604, 256
        $region96: #{tpu_custom_call.1} parent=91 // pred_fallthru
          _
      $region92: #{tpu_custom_call.1} parent=5 // pred_fallthru
        _
    $region6: #{tpu_custom_call.1} parent=1 // loop_footer
      %s27 = sadd.s32 1, %s23
    $region7: #{tpu_custom_call.1} parent=1 // loop_footer_branch
      %22 = sbr.rel target = $region3
    $region8: #{tpu_custom_call.1} parent=1 // loop_exit
      _
    %1610 = vsyncpa [#allocation5], 1
    %s1611 = scalar_lea.sflag [#allocation5], 1
    %1612 = vsyncpa %s1611, 1

</llo_original>
